<compile_context>
chip_gen: v5e
topology: v5e:2x2
jax: 0.10.0
libtpu: 0.0.40
codegen_flags: <defaults>
</compile_context>

<pallas_src>
import functools
import math

import jax
import jax.numpy as jnp
from jax import lax
from jax.experimental import pallas as pl
from jax.experimental.pallas import tpu as pltpu


def qkv_projection_kernel(x_ref, w1_ref, b1_ref, wq_ref, bq_ref, wk_ref, bk_ref,
                          wv_ref, bv_ref, q_ref, k_ref, v_ref, *, n_head, d_k):
    """linear1 + Q/K/V projections; q/k/v written head-major (1, H, TQ, d_k)."""
    f32, bf16 = jnp.float32, jnp.bfloat16
    x = x_ref[0]                                                      # (TQ, d_model) bf16
    x1 = (jnp.dot(x, w1_ref[...], preferred_element_type=f32)
          + b1_ref[...]).astype(bf16)                                 # (TQ, d_ff)
    # Full-width projections keep the MXU N dim filled; the per-head lane slices are
    # then stored head-major so no host-side transpose / extra HBM pass is needed.
    qf = (jnp.dot(x1, wq_ref[...], preferred_element_type=f32)
          + bq_ref[...]).astype(bf16)                                 # pre-scaled by 1/sqrt(d_k)
    kf = (jnp.dot(x1, wk_ref[...], preferred_element_type=f32) + bk_ref[...]).astype(bf16)
    vf = (jnp.dot(x1, wv_ref[...], preferred_element_type=f32) + bv_ref[...]).astype(bf16)
    for h in range(n_head):
        sl = slice(h * d_k, (h + 1) * d_k)
        q_ref[0, h] = qf[:, sl]
        k_ref[0, h] = kf[:, sl]
        v_ref[0, h] = vf[:, sl]


def attn_ffn_vocab_kernel(q_ref, k_ref, v_ref, wo_ref, bo_ref,
                          wf1_ref, bf1_ref, wf2_ref, bf2_ref, w2_ref, b2_ref,
                          out_ref, h2_ref, *, n_head, t_valid, t_padded):
    """Head-batched attention + out-proj + FFN (once per row tile) + tiled vocab proj."""
    f32, bf16 = jnp.float32, jnp.bfloat16

    # Attention / out-projection / FFN only on the first vocab tile of each
    # (batch, row-tile); result cached in VMEM scratch for the remaining vocab tiles.
    @pl.when(pl.program_id(2) == 0)
    def _():
        q = q_ref[0]                                   # (H, TQ, d_k) bf16, pre-scaled
        k = k_ref[0]                                   # (H, T_pad, d_k)
        v = v_ref[0]

        # scores[h, i, j] = sum_d q[h, i, d] * k[h, j, d]   -> (H, TQ, T_pad) f32
        scores = lax.dot_general(q, k, (((2,), (2,)), ((0,), (0,))),
                                 preferred_element_type=f32)
        if t_padded > t_valid:                          # mask padded key positions
            key_idx = lax.broadcasted_iota(jnp.int32, scores.shape, 2)
            scores = jnp.where(key_idx < t_valid, scores,
                               float(jnp.finfo(jnp.float32).min))
        m = jnp.max(scores, axis=-1, keepdims=True)
        e = jnp.exp(scores - m)
        attn = e * pl.reciprocal(jnp.sum(e, axis=-1, keepdims=True), approx=True)

        # ctx[h, i, d] = sum_j attn[h, i, j] * v[h, j, d]   -> (H, TQ, d_k)
        ctx = lax.dot_general(attn.astype(bf16), v, (((2,), (1,)), ((0,), (0,))),
                              preferred_element_type=f32).astype(bf16)

        # concat_h(ctx_h) @ W_o: single full-depth (d_ff) contraction on the MXU;
        # no f32 (H, TQ, d_ff) intermediate, no sum over heads on the VPU.
        ctx_cat = jnp.concatenate([ctx[h] for h in range(n_head)], axis=-1)
        attn_out = (jnp.dot(ctx_cat, wo_ref[...], preferred_element_type=f32)
                    + bo_ref[...])                                    # (TQ, d_ff) f32

        h1 = jnp.maximum(
            jnp.dot(attn_out.astype(bf16), wf1_ref[...], preferred_element_type=f32)
            + bf1_ref[...], 0.0)
        h2 = (jnp.dot(h1.astype(bf16), wf2_ref[...], preferred_element_type=f32)
              + bf2_ref[...])
        h2_ref[...] = h2.astype(bf16)

    # Per-vocab-tile projection; lane-dense (multiple-of-128) bf16 writeback.
    logits = (jnp.dot(h2_ref[...], w2_ref[...], preferred_element_type=f32)
              + b2_ref[...])                                          # (TQ, TN)
    out_ref[0] = logits.astype(out_ref.dtype)


def _row_tiling(T):
    """(row_tile, padded_T). Prefer 256/128-row tiles; otherwise pad (keys masked)."""
    for cand in (256, 128):
        if T % cand == 0:
            return cand, T
    tq = 256 if T > 256 else ((T + 7) // 8) * 8
    return tq, ((T + tq - 1) // tq) * tq


def _vocab_tiling(vocab):
    vocab_p = ((vocab + 127) // 128) * 128
    for cand in (2048, 1024, 512, 256, 128):
        if vocab_p % cand == 0:
            return vocab_p, cand
    return vocab_p, 128


def _vmem_limit_bytes():
    # ~75% of physical VMEM (~96 MiB on v5e/v6e, ~48 MiB on v7x); safe fallback.
    try:
        cap = int(pltpu.get_tpu_info().vmem_capacity_bytes)
    except Exception:
        cap = 64 * 1024 * 1024
    return cap * 3 // 4


def prediction_module(x, params, *, n_head, return_padded=False):
    B, T, d_model = x.shape
    d_ff = params["w1"].shape[1]
    vocab = params["w2"].shape[1]
    d_k = d_ff // n_head
    TQ, T_pad = _row_tiling(T)
    nT = T_pad // TQ
    vocab_p, TN = _vocab_tiling(vocab)
    nV = vocab_p // TN
    f32, bf16 = jnp.float32, jnp.bfloat16
    scale = 1.0 / math.sqrt(d_k)
    vmem_limit = _vmem_limit_bytes()

    # --- host-side operand prep: bf16 weights, folded scale, padded vocab / time ---
    x_bf = x.astype(bf16)
    if T_pad != T:
        x_bf = jnp.pad(x_bf, ((0, 0), (0, T_pad - T), (0, 0)))
    w1 = params["w1"].astype(bf16);   b1 = params["b1"].astype(f32)
    wq = (params["wq"] * scale).astype(bf16)          # fold 1/sqrt(d_k) into Wq, bq
    bq = (params["bq"] * scale).astype(f32)
    wk = params["wk"].astype(bf16);   bk = params["bk"].astype(f32)
    wv = params["wv"].astype(bf16);   bv = params["bv"].astype(f32)
    wo = params["wo"].astype(bf16);   bo = params["bo"].astype(f32)
    wf1 = params["wf1"].astype(bf16); bf1 = params["bf1"].astype(f32)
    wf2 = params["wf2"].astype(bf16); bf2 = params["bf2"].astype(f32)
    w2 = jnp.pad(params["w2"].astype(bf16), ((0, 0), (0, vocab_p - vocab)))
    b2 = jnp.pad(params["b2"].astype(f32), ((0, 0), (0, vocab_p - vocab)))

    def resident(arr, grid_rank):
        """Whole parameter resident in VMEM; constant index_map -> fetched once."""
        zeros = (0,) * arr.ndim
        if grid_rank == 2:
            return pl.BlockSpec(arr.shape, lambda b, t: zeros)
        return pl.BlockSpec(arr.shape, lambda b, t, n: zeros)

    # --- kernel 1: linear1 + Q/K/V projections, head-major output, (batch, rows) grid ---
    qkv_weights = (w1, b1, wq, bq, wk, bk, wv, bv)
    head_shape = jax.ShapeDtypeStruct((B, n_head, T_pad, d_k), bf16)
    head_spec = pl.BlockSpec((1, n_head, TQ, d_k), lambda b, t: (b, 0, t, 0))
    q, k, v = pl.pallas_call(
        functools.partial(qkv_projection_kernel, n_head=n_head, d_k=d_k),
        out_shape=(head_shape,) * 3,
        grid_spec=pltpu.PrefetchScalarGridSpec(
            num_scalar_prefetch=0,
            grid=(B, nT),
            in_specs=[pl.BlockSpec((1, TQ, d_model), lambda b, t: (b, t, 0))]
                     + [resident(w, 2) for w in qkv_weights],
            out_specs=(head_spec,) * 3,
        ),
        compiler_params=pltpu.CompilerParams(
            dimension_semantics=("parallel", "parallel"),
            vmem_limit_bytes=vmem_limit),
    )(x_bf, *qkv_weights)

    # --- kernel 2: attention + out-proj + FFN + tiled vocab projection ---
    resident_weights = (wo, bo, wf1, bf1, wf2, bf2)
    out_p = pl.pallas_call(
        functools.partial(attn_ffn_vocab_kernel, n_head=n_head,
                          t_valid=T, t_padded=T_pad),
        out_shape=jax.ShapeDtypeStruct((B, T_pad, vocab_p), bf16),
        grid_spec=pltpu.PrefetchScalarGridSpec(
            num_scalar_prefetch=0,
            grid=(B, nT, nV),
            in_specs=[pl.BlockSpec((1, n_head, TQ, d_k), lambda b, t, n: (b, 0, t, 0)),
                      pl.BlockSpec((1, n_head, T_pad, d_k), lambda b, t, n: (b, 0, 0, 0)),
                      pl.BlockSpec((1, n_head, T_pad, d_k), lambda b, t, n: (b, 0, 0, 0))]
                     + [resident(w, 3) for w in resident_weights]
                     + [pl.BlockSpec((d_ff, TN), lambda b, t, n: (0, n)),
                        pl.BlockSpec((1, TN), lambda b, t, n: (0, n))],
            out_specs=pl.BlockSpec((1, TQ, TN), lambda b, t, n: (b, t, n)),
            scratch_shapes=[pltpu.VMEM((TQ, d_ff), bf16)],
        ),
        compiler_params=pltpu.CompilerParams(
            dimension_semantics=("parallel", "parallel", "arbitrary"),
            vmem_limit_bytes=vmem_limit),
    )(q, k, v, *resident_weights, w2, b2)

    if return_padded:
        return out_p                      # (B, T_pad, vocab_p) bf16: consumer skips pads
    return out_p[:, :T, :vocab]


def init_params(key, d_model, d_ff, vocab_size):
    ks = jax.random.split(key, 16)

    def lin(kw, kb, fan_in, fan_out):
        # deterministic synthetic init; weight stored as (in, out)
        w = jax.random.normal(kw, (fan_in, fan_out), jnp.float32) * (1.0 / math.sqrt(fan_in))
        b = jax.random.normal(kb, (1, fan_out), jnp.float32) * 0.01
        return w, b

    p = {}
    p["w1"],  p["b1"]  = lin(ks[0],  ks[1],  d_model, d_ff)
    p["wq"],  p["bq"]  = lin(ks[2],  ks[3],  d_ff, d_ff)
    p["wk"],  p["bk"]  = lin(ks[4],  ks[5],  d_ff, d_ff)
    p["wv"],  p["bv"]  = lin(ks[6],  ks[7],  d_ff, d_ff)
    p["wo"],  p["bo"]  = lin(ks[8],  ks[9],  d_ff, d_ff)
    p["wf1"], p["bf1"] = lin(ks[10], ks[11], d_ff, d_ff)
    p["wf2"], p["bf2"] = lin(ks[12], ks[13], d_ff, d_ff)
    p["w2"],  p["b2"]  = lin(ks[14], ks[15], d_ff, vocab_size)
    return p


def reference(x, params, *, n_head):
    # pure-JAX f32 reference matching the PyTorch forward (dropout = identity)
    d_ff = params["w1"].shape[1]
    d_k = d_ff // n_head
    x1 = x @ params["w1"] + params["b1"]
    q = x1 @ params["wq"] + params["bq"]
    k = x1 @ params["wk"] + params["bk"]
    v = x1 @ params["wv"] + params["bv"]
    B, T, _ = x.shape

    def split(a):  # (B,T,d_ff) -> (B,H,T,d_k)
        return a.reshape(B, T, n_head, d_k).transpose(0, 2, 1, 3)

    qh, kh, vh = split(q), split(k), split(v)
    scores = jnp.einsum("bhqd,bhkd->bhqk", qh, kh) / math.sqrt(d_k)
    attn = jax.nn.softmax(scores, axis=-1)
    ctx = jnp.einsum("bhqk,bhkd->bhqd", attn, vh).transpose(0, 2, 1, 3).reshape(B, T, d_ff)
    a_out = ctx @ params["wo"] + params["bo"]
    h1 = jax.nn.relu(a_out @ params["wf1"] + params["bf1"])
    h2 = h1 @ params["wf2"] + params["bf2"]
    return h2 @ params["w2"] + params["b2"]


if __name__ == "__main__":
    B, T = 2, 8
    d_model, d_ff, vocab_size, n_head = 32, 64, 16, 4

    key = jax.random.PRNGKey(0)
    kx, kp = jax.random.split(key)
    x = jax.random.normal(kx, (B, T, d_model), jnp.float32)
    params = init_params(kp, d_model, d_ff, vocab_size)

    pred_fn = jax.jit(lambda xx, pp: prediction_module(xx, pp, n_head=n_head))
    out = jax.block_until_ready(pred_fn(x, params))

    ref = reference(x, params, n_head=n_head)
    assert out.shape == (B, T, vocab_size)
    # bf16 MXU operands / bf16 logits + approx-reciprocal softmax -> loosened tolerance
    rel_err = jnp.linalg.norm((out - ref).astype(jnp.float32)) / jnp.linalg.norm(ref)
    assert float(rel_err) < 5e-2, f"relative error too large: {float(rel_err)}"
    print("KERNEL_OK")
</pallas_src>

<mosaic_0001>
module attributes {stable_mosaic.version = 11 : i64} {
  func.func @qkv_projection_kernel(%arg0: i32, %arg1: i32, %arg2: memref<1x8x32xbf16, #tpu.memory_space<vmem>>, %arg3: memref<32x64xbf16, #tpu.memory_space<vmem>>, %arg4: memref<1x64xf32, #tpu.memory_space<vmem>>, %arg5: memref<64x64xbf16, #tpu.memory_space<vmem>>, %arg6: memref<1x64xf32, #tpu.memory_space<vmem>>, %arg7: memref<64x64xbf16, #tpu.memory_space<vmem>>, %arg8: memref<1x64xf32, #tpu.memory_space<vmem>>, %arg9: memref<64x64xbf16, #tpu.memory_space<vmem>>, %arg10: memref<1x64xf32, #tpu.memory_space<vmem>>, %arg11: memref<1x4x8x16xbf16, #tpu.memory_space<vmem>>, %arg12: memref<1x4x8x16xbf16, #tpu.memory_space<vmem>>, %arg13: memref<1x4x8x16xbf16, #tpu.memory_space<vmem>>) attributes {dimension_semantics = [#tpu.dimension_semantics<parallel>, #tpu.dimension_semantics<parallel>], iteration_bounds = array<i64: 2, 1>, scalar_prefetch = 0 : i64, scratch_operands = 0 : i64, tpu.core_type = #tpu.core_type<tc>, window_params = [{transform_indices = @transform_0, window_bounds = array<i64: 1, 8, 32>}, {pipeline_mode = #tpu.pipeline_mode<synchronous>, transform_indices = @transform_1, window_bounds = array<i64: 32, 64>}, {pipeline_mode = #tpu.pipeline_mode<synchronous>, transform_indices = @transform_2, window_bounds = array<i64: 1, 64>}, {pipeline_mode = #tpu.pipeline_mode<synchronous>, transform_indices = @transform_3, window_bounds = array<i64: 64, 64>}, {pipeline_mode = #tpu.pipeline_mode<synchronous>, transform_indices = @transform_4, window_bounds = array<i64: 1, 64>}, {pipeline_mode = #tpu.pipeline_mode<synchronous>, transform_indices = @transform_5, window_bounds = array<i64: 64, 64>}, {pipeline_mode = #tpu.pipeline_mode<synchronous>, transform_indices = @transform_6, window_bounds = array<i64: 1, 64>}, {pipeline_mode = #tpu.pipeline_mode<synchronous>, transform_indices = @transform_7, window_bounds = array<i64: 64, 64>}, {pipeline_mode = #tpu.pipeline_mode<synchronous>, transform_indices = @transform_8, window_bounds = array<i64: 1, 64>}, {transform_indices = @transform_9, window_bounds = array<i64: 1, 4, 8, 16>}, {transform_indices = @transform_10, window_bounds = array<i64: 1, 4, 8, 16>}, {transform_indices = @transform_11, window_bounds = array<i64: 1, 4, 8, 16>}]} {
    %c0 = arith.constant 0 : index
    %c0_0 = arith.constant 0 : index
    %c0_1 = arith.constant 0 : index
    %0 = vector.load %arg2[%c0, %c0_0, %c0_1] : memref<1x8x32xbf16, #tpu.memory_space<vmem>>, vector<1x8x32xbf16>
    %1 = vector.shape_cast %0 : vector<1x8x32xbf16> to vector<8x32xbf16>
    %c0_2 = arith.constant 0 : index
    %c0_3 = arith.constant 0 : index
    %2 = vector.load %arg3[%c0_2, %c0_3] : memref<32x64xbf16, #tpu.memory_space<vmem>>, vector<32x64xbf16>
    %cst = arith.constant dense<0.000000e+00> : vector<8x64xf32>
    %3 = tpu.matmul %1, %2, %cst {dimension_numbers = #tpu.dot_dimension_numbers<[1], [0], [0], [1], [0, 0, 1, 1], [], []>} : vector<8x32xbf16>, vector<32x64xbf16>, vector<8x64xf32> -> vector<8x64xf32>
    %c0_4 = arith.constant 0 : index
    %c0_5 = arith.constant 0 : index
    %4 = vector.load %arg4[%c0_4, %c0_5] : memref<1x64xf32, #tpu.memory_space<vmem>>, vector<1x64xf32>
    %5 = vector.broadcast %4 : vector<1x64xf32> to vector<8x64xf32>
    %6 = arith.addf %3, %5 : vector<8x64xf32>
    %7 = arith.truncf %6 : vector<8x64xf32> to vector<8x64xbf16>
    %c0_6 = arith.constant 0 : index
    %c0_7 = arith.constant 0 : index
    %8 = vector.load %arg5[%c0_6, %c0_7] : memref<64x64xbf16, #tpu.memory_space<vmem>>, vector<64x64xbf16>
    %cst_8 = arith.constant dense<0.000000e+00> : vector<8x64xf32>
    %9 = tpu.matmul %7, %8, %cst_8 {dimension_numbers = #tpu.dot_dimension_numbers<[1], [0], [0], [1], [0, 0, 1, 1], [], []>} : vector<8x64xbf16>, vector<64x64xbf16>, vector<8x64xf32> -> vector<8x64xf32>
    %c0_9 = arith.constant 0 : index
    %c0_10 = arith.constant 0 : index
    %10 = vector.load %arg6[%c0_9, %c0_10] : memref<1x64xf32, #tpu.memory_space<vmem>>, vector<1x64xf32>
    %11 = vector.broadcast %10 : vector<1x64xf32> to vector<8x64xf32>
    %12 = arith.addf %9, %11 : vector<8x64xf32>
    %13 = arith.truncf %12 : vector<8x64xf32> to vector<8x64xbf16>
    %c0_11 = arith.constant 0 : index
    %c0_12 = arith.constant 0 : index
    %14 = vector.load %arg7[%c0_11, %c0_12] : memref<64x64xbf16, #tpu.memory_space<vmem>>, vector<64x64xbf16>
    %cst_13 = arith.constant dense<0.000000e+00> : vector<8x64xf32>
    %15 = tpu.matmul %7, %14, %cst_13 {dimension_numbers = #tpu.dot_dimension_numbers<[1], [0], [0], [1], [0, 0, 1, 1], [], []>} : vector<8x64xbf16>, vector<64x64xbf16>, vector<8x64xf32> -> vector<8x64xf32>
    %c0_14 = arith.constant 0 : index
    %c0_15 = arith.constant 0 : index
    %16 = vector.load %arg8[%c0_14, %c0_15] : memref<1x64xf32, #tpu.memory_space<vmem>>, vector<1x64xf32>
    %17 = vector.broadcast %16 : vector<1x64xf32> to vector<8x64xf32>
    %18 = arith.addf %15, %17 : vector<8x64xf32>
    %19 = arith.truncf %18 : vector<8x64xf32> to vector<8x64xbf16>
    %c0_16 = arith.constant 0 : index
    %c0_17 = arith.constant 0 : index
    %20 = vector.load %arg9[%c0_16, %c0_17] : memref<64x64xbf16, #tpu.memory_space<vmem>>, vector<64x64xbf16>
    %cst_18 = arith.constant dense<0.000000e+00> : vector<8x64xf32>
    %21 = tpu.matmul %7, %20, %cst_18 {dimension_numbers = #tpu.dot_dimension_numbers<[1], [0], [0], [1], [0, 0, 1, 1], [], []>} : vector<8x64xbf16>, vector<64x64xbf16>, vector<8x64xf32> -> vector<8x64xf32>
    %c0_19 = arith.constant 0 : index
    %c0_20 = arith.constant 0 : index
    %22 = vector.load %arg10[%c0_19, %c0_20] : memref<1x64xf32, #tpu.memory_space<vmem>>, vector<1x64xf32>
    %23 = vector.broadcast %22 : vector<1x64xf32> to vector<8x64xf32>
    %24 = arith.addf %21, %23 : vector<8x64xf32>
    %25 = arith.truncf %24 : vector<8x64xf32> to vector<8x64xbf16>
    %26 = vector.extract_strided_slice %13 {offsets = [0, 0], sizes = [8, 16], strides = [1, 1]} : vector<8x64xbf16> to vector<8x16xbf16>
    %c0_21 = arith.constant 0 : index
    %c0_22 = arith.constant 0 : index
    %c0_23 = arith.constant 0 : index
    %c0_24 = arith.constant 0 : index
    %27 = vector.load %arg11[%c0_21, %c0_22, %c0_23, %c0_24] : memref<1x4x8x16xbf16, #tpu.memory_space<vmem>>, vector<1x1x8x16xbf16>
    %28 = vector.shape_cast %27 : vector<1x1x8x16xbf16> to vector<8x16xbf16>
    %29 = vector.shape_cast %26 : vector<8x16xbf16> to vector<1x1x8x16xbf16>
    tpu.vector_store %arg11[%c0_21, %c0_22, %c0_23, %c0_24], %29 {strides = array<i32>} : memref<1x4x8x16xbf16, #tpu.memory_space<vmem>>, vector<1x1x8x16xbf16>,
    %30 = vector.extract_strided_slice %19 {offsets = [0, 0], sizes = [8, 16], strides = [1, 1]} : vector<8x64xbf16> to vector<8x16xbf16>
    %c0_25 = arith.constant 0 : index
    %c0_26 = arith.constant 0 : index
    %c0_27 = arith.constant 0 : index
    %c0_28 = arith.constant 0 : index
    %31 = vector.load %arg12[%c0_25, %c0_26, %c0_27, %c0_28] : memref<1x4x8x16xbf16, #tpu.memory_space<vmem>>, vector<1x1x8x16xbf16>
    %32 = vector.shape_cast %31 : vector<1x1x8x16xbf16> to vector<8x16xbf16>
    %33 = vector.shape_cast %30 : vector<8x16xbf16> to vector<1x1x8x16xbf16>
    tpu.vector_store %arg12[%c0_25, %c0_26, %c0_27, %c0_28], %33 {strides = array<i32>} : memref<1x4x8x16xbf16, #tpu.memory_space<vmem>>, vector<1x1x8x16xbf16>,
    %34 = vector.extract_strided_slice %25 {offsets = [0, 0], sizes = [8, 16], strides = [1, 1]} : vector<8x64xbf16> to vector<8x16xbf16>
    %c0_29 = arith.constant 0 : index
    %c0_30 = arith.constant 0 : index
    %c0_31 = arith.constant 0 : index
    %c0_32 = arith.constant 0 : index
    %35 = vector.load %arg13[%c0_29, %c0_30, %c0_31, %c0_32] : memref<1x4x8x16xbf16, #tpu.memory_space<vmem>>, vector<1x1x8x16xbf16>
    %36 = vector.shape_cast %35 : vector<1x1x8x16xbf16> to vector<8x16xbf16>
    %37 = vector.shape_cast %34 : vector<8x16xbf16> to vector<1x1x8x16xbf16>
    tpu.vector_store %arg13[%c0_29, %c0_30, %c0_31, %c0_32], %37 {strides = array<i32>} : memref<1x4x8x16xbf16, #tpu.memory_space<vmem>>, vector<1x1x8x16xbf16>,
    %38 = vector.extract_strided_slice %13 {offsets = [0, 16], sizes = [8, 16], strides = [1, 1]} : vector<8x64xbf16> to vector<8x16xbf16>
    %c0_33 = arith.constant 0 : index
    %c1 = arith.constant 1 : index
    %c0_34 = arith.constant 0 : index
    %c0_35 = arith.constant 0 : index
    %39 = vector.load %arg11[%c0_33, %c1, %c0_34, %c0_35] : memref<1x4x8x16xbf16, #tpu.memory_space<vmem>>, vector<1x1x8x16xbf16>
    %40 = vector.shape_cast %39 : vector<1x1x8x16xbf16> to vector<8x16xbf16>
    %41 = vector.shape_cast %38 : vector<8x16xbf16> to vector<1x1x8x16xbf16>
    tpu.vector_store %arg11[%c0_33, %c1, %c0_34, %c0_35], %41 {strides = array<i32>} : memref<1x4x8x16xbf16, #tpu.memory_space<vmem>>, vector<1x1x8x16xbf16>,
    %42 = vector.extract_strided_slice %19 {offsets = [0, 16], sizes = [8, 16], strides = [1, 1]} : vector<8x64xbf16> to vector<8x16xbf16>
    %c0_36 = arith.constant 0 : index
    %c1_37 = arith.constant 1 : index
    %c0_38 = arith.constant 0 : index
    %c0_39 = arith.constant 0 : index
    %43 = vector.load %arg12[%c0_36, %c1_37, %c0_38, %c0_39] : memref<1x4x8x16xbf16, #tpu.memory_space<vmem>>, vector<1x1x8x16xbf16>
    %44 = vector.shape_cast %43 : vector<1x1x8x16xbf16> to vector<8x16xbf16>
    %45 = vector.shape_cast %42 : vector<8x16xbf16> to vector<1x1x8x16xbf16>
    tpu.vector_store %arg12[%c0_36, %c1_37, %c0_38, %c0_39], %45 {strides = array<i32>} : memref<1x4x8x16xbf16, #tpu.memory_space<vmem>>, vector<1x1x8x16xbf16>,
    %46 = vector.extract_strided_slice %25 {offsets = [0, 16], sizes = [8, 16], strides = [1, 1]} : vector<8x64xbf16> to vector<8x16xbf16>
    %c0_40 = arith.constant 0 : index
    %c1_41 = arith.constant 1 : index
    %c0_42 = arith.constant 0 : index
    %c0_43 = arith.constant 0 : index
    %47 = vector.load %arg13[%c0_40, %c1_41, %c0_42, %c0_43] : memref<1x4x8x16xbf16, #tpu.memory_space<vmem>>, vector<1x1x8x16xbf16>
    %48 = vector.shape_cast %47 : vector<1x1x8x16xbf16> to vector<8x16xbf16>
    %49 = vector.shape_cast %46 : vector<8x16xbf16> to vector<1x1x8x16xbf16>
    tpu.vector_store %arg13[%c0_40, %c1_41, %c0_42, %c0_43], %49 {strides = array<i32>} : memref<1x4x8x16xbf16, #tpu.memory_space<vmem>>, vector<1x1x8x16xbf16>,
    %50 = vector.extract_strided_slice %13 {offsets = [0, 32], sizes = [8, 16], strides = [1, 1]} : vector<8x64xbf16> to vector<8x16xbf16>
    %c0_44 = arith.constant 0 : index
    %c2 = arith.constant 2 : index
    %c0_45 = arith.constant 0 : index
    %c0_46 = arith.constant 0 : index
    %51 = vector.load %arg11[%c0_44, %c2, %c0_45, %c0_46] : memref<1x4x8x16xbf16, #tpu.memory_space<vmem>>, vector<1x1x8x16xbf16>
    %52 = vector.shape_cast %51 : vector<1x1x8x16xbf16> to vector<8x16xbf16>
    %53 = vector.shape_cast %50 : vector<8x16xbf16> to vector<1x1x8x16xbf16>
    tpu.vector_store %arg11[%c0_44, %c2, %c0_45, %c0_46], %53 {strides = array<i32>} : memref<1x4x8x16xbf16, #tpu.memory_space<vmem>>, vector<1x1x8x16xbf16>,
    %54 = vector.extract_strided_slice %19 {offsets = [0, 32], sizes = [8, 16], strides = [1, 1]} : vector<8x64xbf16> to vector<8x16xbf16>
    %c0_47 = arith.constant 0 : index
    %c2_48 = arith.constant 2 : index
    %c0_49 = arith.constant 0 : index
    %c0_50 = arith.constant 0 : index
    %55 = vector.load %arg12[%c0_47, %c2_48, %c0_49, %c0_50] : memref<1x4x8x16xbf16, #tpu.memory_space<vmem>>, vector<1x1x8x16xbf16>
    %56 = vector.shape_cast %55 : vector<1x1x8x16xbf16> to vector<8x16xbf16>
    %57 = vector.shape_cast %54 : vector<8x16xbf16> to vector<1x1x8x16xbf16>
    tpu.vector_store %arg12[%c0_47, %c2_48, %c0_49, %c0_50], %57 {strides = array<i32>} : memref<1x4x8x16xbf16, #tpu.memory_space<vmem>>, vector<1x1x8x16xbf16>,
    %58 = vector.extract_strided_slice %25 {offsets = [0, 32], sizes = [8, 16], strides = [1, 1]} : vector<8x64xbf16> to vector<8x16xbf16>
    %c0_51 = arith.constant 0 : index
    %c2_52 = arith.constant 2 : index
    %c0_53 = arith.constant 0 : index
    %c0_54 = arith.constant 0 : index
    %59 = vector.load %arg13[%c0_51, %c2_52, %c0_53, %c0_54] : memref<1x4x8x16xbf16, #tpu.memory_space<vmem>>, vector<1x1x8x16xbf16>
    %60 = vector.shape_cast %59 : vector<1x1x8x16xbf16> to vector<8x16xbf16>
    %61 = vector.shape_cast %58 : vector<8x16xbf16> to vector<1x1x8x16xbf16>
    tpu.vector_store %arg13[%c0_51, %c2_52, %c0_53, %c0_54], %61 {strides = array<i32>} : memref<1x4x8x16xbf16, #tpu.memory_space<vmem>>, vector<1x1x8x16xbf16>,
    %62 = vector.extract_strided_slice %13 {offsets = [0, 48], sizes = [8, 16], strides = [1, 1]} : vector<8x64xbf16> to vector<8x16xbf16>
    %c0_55 = arith.constant 0 : index
    %c3 = arith.constant 3 : index
    %c0_56 = arith.constant 0 : index
    %c0_57 = arith.constant 0 : index
    %63 = vector.load %arg11[%c0_55, %c3, %c0_56, %c0_57] : memref<1x4x8x16xbf16, #tpu.memory_space<vmem>>, vector<1x1x8x16xbf16>
    %64 = vector.shape_cast %63 : vector<1x1x8x16xbf16> to vector<8x16xbf16>
    %65 = vector.shape_cast %62 : vector<8x16xbf16> to vector<1x1x8x16xbf16>
    tpu.vector_store %arg11[%c0_55, %c3, %c0_56, %c0_57], %65 {strides = array<i32>} : memref<1x4x8x16xbf16, #tpu.memory_space<vmem>>, vector<1x1x8x16xbf16>,
    %66 = vector.extract_strided_slice %19 {offsets = [0, 48], sizes = [8, 16], strides = [1, 1]} : vector<8x64xbf16> to vector<8x16xbf16>
    %c0_58 = arith.constant 0 : index
    %c3_59 = arith.constant 3 : index
    %c0_60 = arith.constant 0 : index
    %c0_61 = arith.constant 0 : index
    %67 = vector.load %arg12[%c0_58, %c3_59, %c0_60, %c0_61] : memref<1x4x8x16xbf16, #tpu.memory_space<vmem>>, vector<1x1x8x16xbf16>
    %68 = vector.shape_cast %67 : vector<1x1x8x16xbf16> to vector<8x16xbf16>
    %69 = vector.shape_cast %66 : vector<8x16xbf16> to vector<1x1x8x16xbf16>
    tpu.vector_store %arg12[%c0_58, %c3_59, %c0_60, %c0_61], %69 {strides = array<i32>} : memref<1x4x8x16xbf16, #tpu.memory_space<vmem>>, vector<1x1x8x16xbf16>,
    %70 = vector.extract_strided_slice %25 {offsets = [0, 48], sizes = [8, 16], strides = [1, 1]} : vector<8x64xbf16> to vector<8x16xbf16>
    %c0_62 = arith.constant 0 : index
    %c3_63 = arith.constant 3 : index
    %c0_64 = arith.constant 0 : index
    %c0_65 = arith.constant 0 : index
    %71 = vector.load %arg13[%c0_62, %c3_63, %c0_64, %c0_65] : memref<1x4x8x16xbf16, #tpu.memory_space<vmem>>, vector<1x1x8x16xbf16>
    %72 = vector.shape_cast %71 : vector<1x1x8x16xbf16> to vector<8x16xbf16>
    %73 = vector.shape_cast %70 : vector<8x16xbf16> to vector<1x1x8x16xbf16>
    tpu.vector_store %arg13[%c0_62, %c3_63, %c0_64, %c0_65], %73 {strides = array<i32>} : memref<1x4x8x16xbf16, #tpu.memory_space<vmem>>, vector<1x1x8x16xbf16>,
    return
  }
  func.func @transform_0(%arg0: i32, %arg1: i32) -> (i32, i32, i32) {
    %c0_i32 = arith.constant 0 : i32
    %c0_i32_0 = arith.constant 0 : i32
    return %arg0, %arg1, %c0_i32 : i32, i32, i32
  }
  func.func @transform_1(%arg0: i32, %arg1: i32) -> (i32, i32) {
    %c0_i32 = arith.constant 0 : i32
    %c0_i32_0 = arith.constant 0 : i32
    %c0_i32_1 = arith.constant 0 : i32
    return %c0_i32, %c0_i32_0 : i32, i32
  }
  func.func @transform_2(%arg0: i32, %arg1: i32) -> (i32, i32) {
    %c0_i32 = arith.constant 0 : i32
    %c0_i32_0 = arith.constant 0 : i32
    %c0_i32_1 = arith.constant 0 : i32
    return %c0_i32, %c0_i32_0 : i32, i32
  }
  func.func @transform_3(%arg0: i32, %arg1: i32) -> (i32, i32) {
    %c0_i32 = arith.constant 0 : i32
    %c0_i32_0 = arith.constant 0 : i32
    %c0_i32_1 = arith.constant 0 : i32
    return %c0_i32, %c0_i32_0 : i32, i32
  }
  func.func @transform_4(%arg0: i32, %arg1: i32) -> (i32, i32) {
    %c0_i32 = arith.constant 0 : i32
    %c0_i32_0 = arith.constant 0 : i32
    %c0_i32_1 = arith.constant 0 : i32
    return %c0_i32, %c0_i32_0 : i32, i32
  }
  func.func @transform_5(%arg0: i32, %arg1: i32) -> (i32, i32) {
    %c0_i32 = arith.constant 0 : i32
    %c0_i32_0 = arith.constant 0 : i32
    %c0_i32_1 = arith.constant 0 : i32
    return %c0_i32, %c0_i32_0 : i32, i32
  }
  func.func @transform_6(%arg0: i32, %arg1: i32) -> (i32, i32) {
    %c0_i32 = arith.constant 0 : i32
    %c0_i32_0 = arith.constant 0 : i32
    %c0_i32_1 = arith.constant 0 : i32
    return %c0_i32, %c0_i32_0 : i32, i32
  }
  func.func @transform_7(%arg0: i32, %arg1: i32) -> (i32, i32) {
    %c0_i32 = arith.constant 0 : i32
    %c0_i32_0 = arith.constant 0 : i32
    %c0_i32_1 = arith.constant 0 : i32
    return %c0_i32, %c0_i32_0 : i32, i32
  }
  func.func @transform_8(%arg0: i32, %arg1: i32) -> (i32, i32) {
    %c0_i32 = arith.constant 0 : i32
    %c0_i32_0 = arith.constant 0 : i32
    %c0_i32_1 = arith.constant 0 : i32
    return %c0_i32, %c0_i32_0 : i32, i32
  }
  func.func @transform_9(%arg0: i32, %arg1: i32) -> (i32, i32, i32, i32) {
    %c0_i32 = arith.constant 0 : i32
    %c0_i32_0 = arith.constant 0 : i32
    %c0_i32_1 = arith.constant 0 : i32
    return %arg0, %c0_i32, %arg1, %c0_i32_0 : i32, i32, i32, i32
  }
  func.func @transform_10(%arg0: i32, %arg1: i32) -> (i32, i32, i32, i32) {
    %c0_i32 = arith.constant 0 : i32
    %c0_i32_0 = arith.constant 0 : i32
    %c0_i32_1 = arith.constant 0 : i32
    return %arg0, %c0_i32, %arg1, %c0_i32_0 : i32, i32, i32, i32
  }
  func.func @transform_11(%arg0: i32, %arg1: i32) -> (i32, i32, i32, i32) {
    %c0_i32 = arith.constant 0 : i32
    %c0_i32_0 = arith.constant 0 : i32
    %c0_i32_1 = arith.constant 0 : i32
    return %arg0, %c0_i32, %arg1, %c0_i32_0 : i32, i32, i32, i32
  }
}

module attributes {stable_mosaic.version = 11 : i64} {
  func.func @attn_ffn_vocab_kernel(%arg0: i32, %arg1: i32, %arg2: i32, %arg3: memref<1x4x8x16xbf16, #tpu.memory_space<vmem>>, %arg4: memref<1x4x8x16xbf16, #tpu.memory_space<vmem>>, %arg5: memref<1x4x8x16xbf16, #tpu.memory_space<vmem>>, %arg6: memref<64x64xbf16, #tpu.memory_space<vmem>>, %arg7: memref<1x64xf32, #tpu.memory_space<vmem>>, %arg8: memref<64x64xbf16, #tpu.memory_space<vmem>>, %arg9: memref<1x64xf32, #tpu.memory_space<vmem>>, %arg10: memref<64x64xbf16, #tpu.memory_space<vmem>>, %arg11: memref<1x64xf32, #tpu.memory_space<vmem>>, %arg12: memref<64x128xbf16, #tpu.memory_space<vmem>>, %arg13: memref<1x128xf32, #tpu.memory_space<vmem>>, %arg14: memref<1x8x128xbf16, #tpu.memory_space<vmem>>, %arg15: memref<8x64xbf16, #tpu.memory_space<vmem>>) attributes {dimension_semantics = [#tpu.dimension_semantics<parallel>, #tpu.dimension_semantics<parallel>, #tpu.dimension_semantics<arbitrary>], iteration_bounds = array<i64: 2, 1, 1>, scalar_prefetch = 0 : i64, scratch_operands = 1 : i64, tpu.core_type = #tpu.core_type<tc>, window_params = [{transform_indices = @transform_0, window_bounds = array<i64: 1, 4, 8, 16>}, {transform_indices = @transform_1, window_bounds = array<i64: 1, 4, 8, 16>}, {transform_indices = @transform_2, window_bounds = array<i64: 1, 4, 8, 16>}, {pipeline_mode = #tpu.pipeline_mode<synchronous>, transform_indices = @transform_3, window_bounds = array<i64: 64, 64>}, {pipeline_mode = #tpu.pipeline_mode<synchronous>, transform_indices = @transform_4, window_bounds = array<i64: 1, 64>}, {pipeline_mode = #tpu.pipeline_mode<synchronous>, transform_indices = @transform_5, window_bounds = array<i64: 64, 64>}, {pipeline_mode = #tpu.pipeline_mode<synchronous>, transform_indices = @transform_6, window_bounds = array<i64: 1, 64>}, {pipeline_mode = #tpu.pipeline_mode<synchronous>, transform_indices = @transform_7, window_bounds = array<i64: 64, 64>}, {pipeline_mode = #tpu.pipeline_mode<synchronous>, transform_indices = @transform_8, window_bounds = array<i64: 1, 64>}, {transform_indices = @transform_9, window_bounds = array<i64: 64, 128>}, {transform_indices = @transform_10, window_bounds = array<i64: 1, 128>}, {transform_indices = @transform_11, window_bounds = array<i64: 1, 8, 128>}]} {
    %c0_i32 = arith.constant 0 : i32
    %0 = arith.cmpi eq, %arg2, %c0_i32 : i32
    %1 = arith.extui %0 : i1 to i32
    %c0_i32_0 = arith.constant 0 : i32
    %2 = arith.cmpi ne, %1, %c0_i32_0 : i32
    scf.if %2 {
      %c0_9 = arith.constant 0 : index
      %c0_10 = arith.constant 0 : index
      %c0_11 = arith.constant 0 : index
      %c0_12 = arith.constant 0 : index
      %13 = vector.load %arg3[%c0_9, %c0_10, %c0_11, %c0_12] : memref<1x4x8x16xbf16, #tpu.memory_space<vmem>>, vector<1x4x8x16xbf16>
      %14 = vector.shape_cast %13 : vector<1x4x8x16xbf16> to vector<4x8x16xbf16>
      %c0_13 = arith.constant 0 : index
      %c0_14 = arith.constant 0 : index
      %c0_15 = arith.constant 0 : index
      %c0_16 = arith.constant 0 : index
      %15 = vector.load %arg4[%c0_13, %c0_14, %c0_15, %c0_16] : memref<1x4x8x16xbf16, #tpu.memory_space<vmem>>, vector<1x4x8x16xbf16>
      %16 = vector.shape_cast %15 : vector<1x4x8x16xbf16> to vector<4x8x16xbf16>
      %c0_17 = arith.constant 0 : index
      %c0_18 = arith.constant 0 : index
      %c0_19 = arith.constant 0 : index
      %c0_20 = arith.constant 0 : index
      %17 = vector.load %arg5[%c0_17, %c0_18, %c0_19, %c0_20] : memref<1x4x8x16xbf16, #tpu.memory_space<vmem>>, vector<1x4x8x16xbf16>
      %18 = vector.shape_cast %17 : vector<1x4x8x16xbf16> to vector<4x8x16xbf16>
      %cst_21 = arith.constant dense<0.000000e+00> : vector<4x8x8xf32>
      %19 = tpu.matmul %14, %16, %cst_21 {dimension_numbers = #tpu.dot_dimension_numbers<[2], [2], [1], [1], [0, 0, 0, 1, 1, 1], [0], [0]>} : vector<4x8x16xbf16>, vector<4x8x16xbf16>, vector<4x8x8xf32> -> vector<4x8x8xf32>
      %cst_22 = arith.constant dense<0xFF800000> : vector<4x8xf32>
      %20 = vector.multi_reduction <maximumf>, %19, %cst_22 [2] : vector<4x8x8xf32> to vector<4x8xf32>
      %21 = vector.shape_cast %20 : vector<4x8xf32> to vector<4x8x1xf32>
      %22 = vector.broadcast %21 : vector<4x8x1xf32> to vector<4x8x8xf32>
      %23 = arith.subf %19, %22 : vector<4x8x8xf32>
      %24 = math.exp %23 : vector<4x8x8xf32>
      %cst_23 = arith.constant dense<0.000000e+00> : vector<4x8xf32>
      %25 = vector.multi_reduction <add>, %24, %cst_23 [2] : vector<4x8x8xf32> to vector<4x8xf32>
      %26 = vector.shape_cast %25 : vector<4x8xf32> to vector<4x8x1xf32>
      %27 = tpu.reciprocal %26 {approx = true} : vector<4x8x1xf32> -> vector<4x8x1xf32>
      %28 = vector.broadcast %27 : vector<4x8x1xf32> to vector<4x8x8xf32>
      %29 = arith.mulf %24, %28 : vector<4x8x8xf32>
      %30 = arith.truncf %29 : vector<4x8x8xf32> to vector<4x8x8xbf16>
      %cst_24 = arith.constant dense<0.000000e+00> : vector<4x8x16xf32>
      %31 = tpu.matmul %30, %18, %cst_24 {dimension_numbers = #tpu.dot_dimension_numbers<[2], [1], [1], [2], [0, 0, 0, 1, 1, 2], [0], [0]>} : vector<4x8x8xbf16>, vector<4x8x16xbf16>, vector<4x8x16xf32> -> vector<4x8x16xf32>
      %32 = arith.truncf %31 : vector<4x8x16xf32> to vector<4x8x16xbf16>
      %33 = vector.extract_strided_slice %32 {offsets = [0, 0, 0], sizes = [1, 8, 16], strides = [1, 1, 1]} : vector<4x8x16xbf16> to vector<1x8x16xbf16>
      %34 = vector.shape_cast %33 : vector<1x8x16xbf16> to vector<8x16xbf16>
      %35 = vector.extract_strided_slice %32 {offsets = [1, 0, 0], sizes = [1, 8, 16], strides = [1, 1, 1]} : vector<4x8x16xbf16> to vector<1x8x16xbf16>
      %36 = vector.shape_cast %35 : vector<1x8x16xbf16> to vector<8x16xbf16>
      %37 = vector.extract_strided_slice %32 {offsets = [2, 0, 0], sizes = [1, 8, 16], strides = [1, 1, 1]} : vector<4x8x16xbf16> to vector<1x8x16xbf16>
      %38 = vector.shape_cast %37 : vector<1x8x16xbf16> to vector<8x16xbf16>
      %39 = vector.extract_strided_slice %32 {offsets = [3, 0, 0], sizes = [1, 8, 16], strides = [1, 1, 1]} : vector<4x8x16xbf16> to vector<1x8x16xbf16>
      %40 = vector.shape_cast %39 : vector<1x8x16xbf16> to vector<8x16xbf16>
      %41 = tpu.concatenate %34, %36, %38, %40 in 1 : vector<8x16xbf16>, vector<8x16xbf16>, vector<8x16xbf16>, vector<8x16xbf16> -> vector<8x64xbf16>
      %c0_25 = arith.constant 0 : index
      %c0_26 = arith.constant 0 : index
      %42 = vector.load %arg6[%c0_25, %c0_26] : memref<64x64xbf16, #tpu.memory_space<vmem>>, vector<64x64xbf16>
      %cst_27 = arith.constant dense<0.000000e+00> : vector<8x64xf32>
      %43 = tpu.matmul %41, %42, %cst_27 {dimension_numbers = #tpu.dot_dimension_numbers<[1], [0], [0], [1], [0, 0, 1, 1], [], []>} : vector<8x64xbf16>, vector<64x64xbf16>, vector<8x64xf32> -> vector<8x64xf32>
      %c0_28 = arith.constant 0 : index
      %c0_29 = arith.constant 0 : index
      %44 = vector.load %arg7[%c0_28, %c0_29] : memref<1x64xf32, #tpu.memory_space<vmem>>, vector<1x64xf32>
      %45 = vector.broadcast %44 : vector<1x64xf32> to vector<8x64xf32>
      %46 = arith.addf %43, %45 : vector<8x64xf32>
      %47 = arith.truncf %46 : vector<8x64xf32> to vector<8x64xbf16>
      %c0_30 = arith.constant 0 : index
      %c0_31 = arith.constant 0 : index
      %48 = vector.load %arg8[%c0_30, %c0_31] : memref<64x64xbf16, #tpu.memory_space<vmem>>, vector<64x64xbf16>
      %cst_32 = arith.constant dense<0.000000e+00> : vector<8x64xf32>
      %49 = tpu.matmul %47, %48, %cst_32 {dimension_numbers = #tpu.dot_dimension_numbers<[1], [0], [0], [1], [0, 0, 1, 1], [], []>} : vector<8x64xbf16>, vector<64x64xbf16>, vector<8x64xf32> -> vector<8x64xf32>
      %c0_33 = arith.constant 0 : index
      %c0_34 = arith.constant 0 : index
      %50 = vector.load %arg9[%c0_33, %c0_34] : memref<1x64xf32, #tpu.memory_space<vmem>>, vector<1x64xf32>
      %51 = vector.broadcast %50 : vector<1x64xf32> to vector<8x64xf32>
      %52 = arith.addf %49, %51 : vector<8x64xf32>
      %cst_35 = arith.constant 0.000000e+00 : f32
      %53 = vector.broadcast %cst_35 : f32 to vector<8x64xf32>
      %54 = arith.maximumf %52, %53 : vector<8x64xf32>
      %55 = arith.truncf %54 : vector<8x64xf32> to vector<8x64xbf16>
      %c0_36 = arith.constant 0 : index
      %c0_37 = arith.constant 0 : index
      %56 = vector.load %arg10[%c0_36, %c0_37] : memref<64x64xbf16, #tpu.memory_space<vmem>>, vector<64x64xbf16>
      %cst_38 = arith.constant dense<0.000000e+00> : vector<8x64xf32>
      %57 = tpu.matmul %55, %56, %cst_38 {dimension_numbers = #tpu.dot_dimension_numbers<[1], [0], [0], [1], [0, 0, 1, 1], [], []>} : vector<8x64xbf16>, vector<64x64xbf16>, vector<8x64xf32> -> vector<8x64xf32>
      %c0_39 = arith.constant 0 : index
      %c0_40 = arith.constant 0 : index
      %58 = vector.load %arg11[%c0_39, %c0_40] : memref<1x64xf32, #tpu.memory_space<vmem>>, vector<1x64xf32>
      %59 = vector.broadcast %58 : vector<1x64xf32> to vector<8x64xf32>
      %60 = arith.addf %57, %59 : vector<8x64xf32>
      %61 = arith.truncf %60 : vector<8x64xf32> to vector<8x64xbf16>
      %c0_41 = arith.constant 0 : index
      %c0_42 = arith.constant 0 : index
      %62 = vector.load %arg15[%c0_41, %c0_42] : memref<8x64xbf16, #tpu.memory_space<vmem>>, vector<8x64xbf16>
      tpu.vector_store %arg15[%c0_41, %c0_42], %61 {strides = array<i32>} : memref<8x64xbf16, #tpu.memory_space<vmem>>, vector<8x64xbf16>,
    } else {
    }
    %c0 = arith.constant 0 : index
    %c0_1 = arith.constant 0 : index
    %3 = vector.load %arg15[%c0, %c0_1] : memref<8x64xbf16, #tpu.memory_space<vmem>>, vector<8x64xbf16>
    %c0_2 = arith.constant 0 : index
    %c0_3 = arith.constant 0 : index
    %4 = vector.load %arg12[%c0_2, %c0_3] : memref<64x128xbf16, #tpu.memory_space<vmem>>, vector<64x128xbf16>
    %cst = arith.constant dense<0.000000e+00> : vector<8x128xf32>
    %5 = tpu.matmul %3, %4, %cst {dimension_numbers = #tpu.dot_dimension_numbers<[1], [0], [0], [1], [0, 0, 1, 1], [], []>} : vector<8x64xbf16>, vector<64x128xbf16>, vector<8x128xf32> -> vector<8x128xf32>
    %c0_4 = arith.constant 0 : index
    %c0_5 = arith.constant 0 : index
    %6 = vector.load %arg13[%c0_4, %c0_5] : memref<1x128xf32, #tpu.memory_space<vmem>>, vector<1x128xf32>
    %7 = vector.broadcast %6 : vector<1x128xf32> to vector<8x128xf32>
    %8 = arith.addf %5, %7 : vector<8x128xf32>
    %9 = arith.truncf %8 : vector<8x128xf32> to vector<8x128xbf16>
    %c0_6 = arith.constant 0 : index
    %c0_7 = arith.constant 0 : index
    %c0_8 = arith.constant 0 : index
    %10 = vector.load %arg14[%c0_6, %c0_7, %c0_8] : memref<1x8x128xbf16, #tpu.memory_space<vmem>>, vector<1x8x128xbf16>
    %11 = vector.shape_cast %10 : vector<1x8x128xbf16> to vector<8x128xbf16>
    %12 = vector.shape_cast %9 : vector<8x128xbf16> to vector<1x8x128xbf16>
    tpu.vector_store %arg14[%c0_6, %c0_7, %c0_8], %12 {strides = array<i32>} : memref<1x8x128xbf16, #tpu.memory_space<vmem>>, vector<1x8x128xbf16>,
    return
  }
  func.func @transform_0(%arg0: i32, %arg1: i32, %arg2: i32) -> (i32, i32, i32, i32) {
    %c0_i32 = arith.constant 0 : i32
    %c0_i32_0 = arith.constant 0 : i32
    %c0_i32_1 = arith.constant 0 : i32
    return %arg0, %c0_i32, %arg1, %c0_i32_0 : i32, i32, i32, i32
  }
  func.func @transform_1(%arg0: i32, %arg1: i32, %arg2: i32) -> (i32, i32, i32, i32) {
    %c0_i32 = arith.constant 0 : i32
    %c0_i32_0 = arith.constant 0 : i32
    %c0_i32_1 = arith.constant 0 : i32
    %c0_i32_2 = arith.constant 0 : i32
    return %arg0, %c0_i32, %c0_i32_0, %c0_i32_1 : i32, i32, i32, i32
  }
  func.func @transform_2(%arg0: i32, %arg1: i32, %arg2: i32) -> (i32, i32, i32, i32) {
    %c0_i32 = arith.constant 0 : i32
    %c0_i32_0 = arith.constant 0 : i32
    %c0_i32_1 = arith.constant 0 : i32
    %c0_i32_2 = arith.constant 0 : i32
    return %arg0, %c0_i32, %c0_i32_0, %c0_i32_1 : i32, i32, i32, i32
  }
  func.func @transform_3(%arg0: i32, %arg1: i32, %arg2: i32) -> (i32, i32) {
    %c0_i32 = arith.constant 0 : i32
    %c0_i32_0 = arith.constant 0 : i32
    %c0_i32_1 = arith.constant 0 : i32
    return %c0_i32, %c0_i32_0 : i32, i32
  }
  func.func @transform_4(%arg0: i32, %arg1: i32, %arg2: i32) -> (i32, i32) {
    %c0_i32 = arith.constant 0 : i32
    %c0_i32_0 = arith.constant 0 : i32
    %c0_i32_1 = arith.constant 0 : i32
    return %c0_i32, %c0_i32_0 : i32, i32
  }
  func.func @transform_5(%arg0: i32, %arg1: i32, %arg2: i32) -> (i32, i32) {
    %c0_i32 = arith.constant 0 : i32
    %c0_i32_0 = arith.constant 0 : i32
    %c0_i32_1 = arith.constant 0 : i32
    return %c0_i32, %c0_i32_0 : i32, i32
  }
  func.func @transform_6(%arg0: i32, %arg1: i32, %arg2: i32) -> (i32, i32) {
    %c0_i32 = arith.constant 0 : i32
    %c0_i32_0 = arith.constant 0 : i32
    %c0_i32_1 = arith.constant 0 : i32
    return %c0_i32, %c0_i32_0 : i32, i32
  }
  func.func @transform_7(%arg0: i32, %arg1: i32, %arg2: i32) -> (i32, i32) {
    %c0_i32 = arith.constant 0 : i32
    %c0_i32_0 = arith.constant 0 : i32
    %c0_i32_1 = arith.constant 0 : i32
    return %c0_i32, %c0_i32_0 : i32, i32
  }
  func.func @transform_8(%arg0: i32, %arg1: i32, %arg2: i32) -> (i32, i32) {
    %c0_i32 = arith.constant 0 : i32
    %c0_i32_0 = arith.constant 0 : i32
    %c0_i32_1 = arith.constant 0 : i32
    return %c0_i32, %c0_i32_0 : i32, i32
  }
  func.func @transform_9(%arg0: i32, %arg1: i32, %arg2: i32) -> (i32, i32) {
    %c0_i32 = arith.constant 0 : i32
    %c0_i32_0 = arith.constant 0 : i32
    return %c0_i32, %arg2 : i32, i32
  }
  func.func @transform_10(%arg0: i32, %arg1: i32, %arg2: i32) -> (i32, i32) {
    %c0_i32 = arith.constant 0 : i32
    %c0_i32_0 = arith.constant 0 : i32
    return %c0_i32, %arg2 : i32, i32
  }
  func.func @transform_11(%arg0: i32, %arg1: i32, %arg2: i32) -> (i32, i32, i32) {
    %c0_i32 = arith.constant 0 : i32
    return %arg0, %arg1, %arg2 : i32, i32, i32
  }
}

</mosaic_0001>

<llo_original>
// kernel: _lambda_.2
$region0: #{_lambda_.2}
  #allocation0 [shape = 'u32[]', space=smem, size = 0x4, offset = 0x4, fixed_abs, tag = 'smem constant byte address 0x4 - core index']
  #allocation1 [shape = 'u32[72,128]{1,0:T(1,128)}', space=vmem, size = 0x9000, scoped, tag = 'internal scratch']
  %s0 = inlined_call_operand.vmem [shape: bf16[2,8,32], index: 0, kind: input, shape index: {}]
  %s1 = inlined_call_operand.vmem [shape: bf16[32,64], index: 1, kind: input, shape index: {}]
  %s2 = inlined_call_operand.vmem [shape: f32[1,64], index: 2, kind: input, shape index: {}]
  %s3 = inlined_call_operand.vmem [shape: bf16[64,64], index: 3, kind: input, shape index: {}]
  %s4 = inlined_call_operand.vmem [shape: f32[1,64], index: 4, kind: input, shape index: {}]
  %s5 = inlined_call_operand.vmem [shape: bf16[64,64], index: 5, kind: input, shape index: {}]
  %s6 = inlined_call_operand.vmem [shape: f32[1,64], index: 6, kind: input, shape index: {}]
  %s7 = inlined_call_operand.vmem [shape: bf16[64,64], index: 7, kind: input, shape index: {}]
  %s8 = inlined_call_operand.vmem [shape: f32[1,64], index: 8, kind: input, shape index: {}]
  %s9 = inlined_call_operand.vmem [shape: bf16[2,4,8,16], index: 9, kind: output, shape index: {0}]
  %s10 = inlined_call_operand.vmem [shape: bf16[2,4,8,16], index: 10, kind: output, shape index: {1}]
  %s11 = inlined_call_operand.vmem [shape: bf16[2,4,8,16], index: 11, kind: output, shape index: {2}]
  %12 = xla_tuple %s9, %s10, %s11
  %s13 = sld [smem:[#allocation0]]
  $region85: #{_lambda_.2} parent=0
    _
  %s15 = ssub.s32 1, %s13
  %s16 = scalar_select 0, %s15, %s13
  loop: start=0, step=1, limit=4
  $region2: #{_lambda_.2} parent=0 // loop_pre_header
    _
  $region3: #{_lambda_.2} parent=0 // loop_header
    %s18 = sphi 0, %s22
    %p19 = scmp.ge.s32.totalorder %s18, 4
    %s25 = sphi 0, %s37
    %s26 = sphi 0, %s33
    %s27 = sphi 0, %s25
    %s28 = sphi 0, %s26
    %s29 = sphi 0, %s27
    %s30 = sphi 0, %s28
    %s42 = sphi 0, %s44
    %s45 = sphi 0, %s42
    %s46 = sphi 0, %s45
    %s62 = sphi 0, %s46
    %s66 = sphi 0, %s66
    %s68 = sphi 0, %s66
    %s69 = sphi 0, %s68
    %s83 = sphi 0, %s69
    %s87 = sphi 0, %s87
    %s89 = sphi 0, %s87
    %s90 = sphi 0, %s89
    %s104 = sphi 0, %s90
    %s108 = sphi 0, %s108
    %s110 = sphi 0, %s108
    %s111 = sphi 0, %s110
    %s125 = sphi 0, %s111
    %s129 = sphi 0, %s129
    %s131 = sphi 0, %s129
    %s132 = sphi 0, %s131
    %s146 = sphi 0, %s132
    %s150 = sphi 0, %s150
    %s152 = sphi 0, %s150
    %s153 = sphi 0, %s152
    %s167 = sphi 0, %s153
    %s171 = sphi 0, %s171
    %s173 = sphi 0, %s171
    %s174 = sphi 0, %s173
    %s188 = sphi 0, %s174
    %s192 = sphi 0, %s192
    %s194 = sphi 0, %s192
    %s195 = sphi 0, %s194
    %s209 = sphi 0, %s195
    %s213 = sphi 0, %s213
    %s215 = sphi 0, %s213
    %s216 = sphi 0, %s215
    %s230 = sphi 0, %s216
    %s238 = sphi 0, %s240
    %s241 = sphi 0, %s238
    %s242 = sphi 0, %s241
    %s258 = sphi 0, %s242
    %s266 = sphi 0, %s268
    %s269 = sphi 0, %s266
    %s270 = sphi 0, %s269
    %s286 = sphi 0, %s270
    %s294 = sphi 0, %s296
    %s297 = sphi 0, %s294
    %s298 = sphi 0, %s297
    %s314 = sphi 0, %s298
  $region4: #{_lambda_.2} parent=0 // loop_header_branch
    %21 = sbr.rel (%p19) target = $region8
  $region5: #{_lambda_.2} parent=0 // loop_body
    %s23 = ssub.s32 %s18, 1
    %s24 = ssub.s32 %s18, 2
    %s31 = sadd.s32 1, %s26
    %p32 = scmp.ge.s32.totalorder %s31, 1
    %s33 = scalar_select %p32, 0, %s31
    %s34 = sadd.s32 1, %s25
    %s35 = scalar_select %p32, %s34, %s25
    %p36 = scmp.ge.s32.totalorder %s35, 2
    %s37 = scalar_select %p36, 0, %s35
    %s38 = ssub.s32 %s25, %s37
    %s39 = ssub.s32 %s26, %s33
    %s40 = sor.u32 %s38, %s39
    %p41 = scmp.eq.s32.totalorder %s40, 0
    %s43 = sadd.s32 %s42, 1
    %s44 = scalar_select %p41, %s42, %s43
    %p47 = pneg %p41
    %p48 = scmp.eq.s32.totalorder %s18, 1
    %p49 = por %p47, %p48
    %p50 = scmp.ne.s32.totalorder %s42, %s45
    %p51 = scmp.eq.s32.totalorder %s18, 0
    %p52 = por %p50, %p51
    %p53 = scmp.ne.s32.totalorder %s42, %s45
    %p54 = scmp.eq.s32.totalorder %s23, 1
    %p55 = por %p53, %p54
    %p56 = scmp.ne.s32.totalorder %s45, %s46
    %p57 = scmp.eq.s32.totalorder %s23, 0
    %p58 = por %p56, %p57
    %p59 = scmp.ne.s32.totalorder %s45, %s46
    %p60 = scmp.eq.s32.totalorder %s24, 1
    %p61 = por %p59, %p60
    %p63 = scmp.ne.s32.totalorder %s46, %s62
    %p64 = scmp.eq.s32.totalorder %s24, 0
    %p65 = por %p63, %p64
    %s67 = sadd.s32 %s66, 1
    %p70 = scmp.eq.s32.totalorder %s18, 1
    %p71 = scmp.ne.s32.totalorder %s66, %s68
    %p72 = scmp.eq.s32.totalorder %s18, 0
    %p73 = por %p71, %p72
    %p74 = scmp.ne.s32.totalorder %s66, %s68
    %p75 = scmp.eq.s32.totalorder %s23, 1
    %p76 = por %p74, %p75
    %p77 = scmp.ne.s32.totalorder %s68, %s69
    %p78 = scmp.eq.s32.totalorder %s23, 0
    %p79 = por %p77, %p78
    %p80 = scmp.ne.s32.totalorder %s68, %s69
    %p81 = scmp.eq.s32.totalorder %s24, 1
    %p82 = por %p80, %p81
    %p84 = scmp.ne.s32.totalorder %s69, %s83
    %p85 = scmp.eq.s32.totalorder %s24, 0
    %p86 = por %p84, %p85
    %s88 = sadd.s32 %s87, 1
    %p91 = scmp.eq.s32.totalorder %s18, 1
    %p92 = scmp.ne.s32.totalorder %s87, %s89
    %p93 = scmp.eq.s32.totalorder %s18, 0
    %p94 = por %p92, %p93
    %p95 = scmp.ne.s32.totalorder %s87, %s89
    %p96 = scmp.eq.s32.totalorder %s23, 1
    %p97 = por %p95, %p96
    %p98 = scmp.ne.s32.totalorder %s89, %s90
    %p99 = scmp.eq.s32.totalorder %s23, 0
    %p100 = por %p98, %p99
    %p101 = scmp.ne.s32.totalorder %s89, %s90
    %p102 = scmp.eq.s32.totalorder %s24, 1
    %p103 = por %p101, %p102
    %p105 = scmp.ne.s32.totalorder %s90, %s104
    %p106 = scmp.eq.s32.totalorder %s24, 0
    %p107 = por %p105, %p106
    %s109 = sadd.s32 %s108, 1
    %p112 = scmp.eq.s32.totalorder %s18, 1
    %p113 = scmp.ne.s32.totalorder %s108, %s110
    %p114 = scmp.eq.s32.totalorder %s18, 0
    %p115 = por %p113, %p114
    %p116 = scmp.ne.s32.totalorder %s108, %s110
    %p117 = scmp.eq.s32.totalorder %s23, 1
    %p118 = por %p116, %p117
    %p119 = scmp.ne.s32.totalorder %s110, %s111
    %p120 = scmp.eq.s32.totalorder %s23, 0
    %p121 = por %p119, %p120
    %p122 = scmp.ne.s32.totalorder %s110, %s111
    %p123 = scmp.eq.s32.totalorder %s24, 1
    %p124 = por %p122, %p123
    %p126 = scmp.ne.s32.totalorder %s111, %s125
    %p127 = scmp.eq.s32.totalorder %s24, 0
    %p128 = por %p126, %p127
    %s130 = sadd.s32 %s129, 1
    %p133 = scmp.eq.s32.totalorder %s18, 1
    %p134 = scmp.ne.s32.totalorder %s129, %s131
    %p135 = scmp.eq.s32.totalorder %s18, 0
    %p136 = por %p134, %p135
    %p137 = scmp.ne.s32.totalorder %s129, %s131
    %p138 = scmp.eq.s32.totalorder %s23, 1
    %p139 = por %p137, %p138
    %p140 = scmp.ne.s32.totalorder %s131, %s132
    %p141 = scmp.eq.s32.totalorder %s23, 0
    %p142 = por %p140, %p141
    %p143 = scmp.ne.s32.totalorder %s131, %s132
    %p144 = scmp.eq.s32.totalorder %s24, 1
    %p145 = por %p143, %p144
    %p147 = scmp.ne.s32.totalorder %s132, %s146
    %p148 = scmp.eq.s32.totalorder %s24, 0
    %p149 = por %p147, %p148
    %s151 = sadd.s32 %s150, 1
    %p154 = scmp.eq.s32.totalorder %s18, 1
    %p155 = scmp.ne.s32.totalorder %s150, %s152
    %p156 = scmp.eq.s32.totalorder %s18, 0
    %p157 = por %p155, %p156
    %p158 = scmp.ne.s32.totalorder %s150, %s152
    %p159 = scmp.eq.s32.totalorder %s23, 1
    %p160 = por %p158, %p159
    %p161 = scmp.ne.s32.totalorder %s152, %s153
    %p162 = scmp.eq.s32.totalorder %s23, 0
    %p163 = por %p161, %p162
    %p164 = scmp.ne.s32.totalorder %s152, %s153
    %p165 = scmp.eq.s32.totalorder %s24, 1
    %p166 = por %p164, %p165
    %p168 = scmp.ne.s32.totalorder %s153, %s167
    %p169 = scmp.eq.s32.totalorder %s24, 0
    %p170 = por %p168, %p169
    %s172 = sadd.s32 %s171, 1
    %p175 = scmp.eq.s32.totalorder %s18, 1
    %p176 = scmp.ne.s32.totalorder %s171, %s173
    %p177 = scmp.eq.s32.totalorder %s18, 0
    %p178 = por %p176, %p177
    %p179 = scmp.ne.s32.totalorder %s171, %s173
    %p180 = scmp.eq.s32.totalorder %s23, 1
    %p181 = por %p179, %p180
    %p182 = scmp.ne.s32.totalorder %s173, %s174
    %p183 = scmp.eq.s32.totalorder %s23, 0
    %p184 = por %p182, %p183
    %p185 = scmp.ne.s32.totalorder %s173, %s174
    %p186 = scmp.eq.s32.totalorder %s24, 1
    %p187 = por %p185, %p186
    %p189 = scmp.ne.s32.totalorder %s174, %s188
    %p190 = scmp.eq.s32.totalorder %s24, 0
    %p191 = por %p189, %p190
    %s193 = sadd.s32 %s192, 1
    %p196 = scmp.eq.s32.totalorder %s18, 1
    %p197 = scmp.ne.s32.totalorder %s192, %s194
    %p198 = scmp.eq.s32.totalorder %s18, 0
    %p199 = por %p197, %p198
    %p200 = scmp.ne.s32.totalorder %s192, %s194
    %p201 = scmp.eq.s32.totalorder %s23, 1
    %p202 = por %p200, %p201
    %p203 = scmp.ne.s32.totalorder %s194, %s195
    %p204 = scmp.eq.s32.totalorder %s23, 0
    %p205 = por %p203, %p204
    %p206 = scmp.ne.s32.totalorder %s194, %s195
    %p207 = scmp.eq.s32.totalorder %s24, 1
    %p208 = por %p206, %p207
    %p210 = scmp.ne.s32.totalorder %s195, %s209
    %p211 = scmp.eq.s32.totalorder %s24, 0
    %p212 = por %p210, %p211
    %s214 = sadd.s32 %s213, 1
    %p217 = scmp.eq.s32.totalorder %s18, 1
    %p218 = scmp.ne.s32.totalorder %s213, %s215
    %p219 = scmp.eq.s32.totalorder %s18, 0
    %p220 = por %p218, %p219
    %p221 = scmp.ne.s32.totalorder %s213, %s215
    %p222 = scmp.eq.s32.totalorder %s23, 1
    %p223 = por %p221, %p222
    %p224 = scmp.ne.s32.totalorder %s215, %s216
    %p225 = scmp.eq.s32.totalorder %s23, 0
    %p226 = por %p224, %p225
    %p227 = scmp.ne.s32.totalorder %s215, %s216
    %p228 = scmp.eq.s32.totalorder %s24, 1
    %p229 = por %p227, %p228
    %p231 = scmp.ne.s32.totalorder %s216, %s230
    %p232 = scmp.eq.s32.totalorder %s24, 0
    %p233 = por %p231, %p232
    %s234 = ssub.s32 %s25, %s37
    %s235 = ssub.s32 %s26, %s33
    %s236 = sor.u32 %s234, %s235
    %p237 = scmp.eq.s32.totalorder %s236, 0
    %s239 = sadd.s32 %s238, 1
    %s240 = scalar_select %p237, %s238, %s239
    %p243 = pneg %p237
    %p244 = scmp.eq.s32.totalorder %s18, 1
    %p245 = por %p243, %p244
    %p246 = scmp.ne.s32.totalorder %s238, %s241
    %p247 = scmp.eq.s32.totalorder %s18, 0
    %p248 = por %p246, %p247
    %p249 = scmp.ne.s32.totalorder %s238, %s241
    %p250 = scmp.eq.s32.totalorder %s23, 1
    %p251 = por %p249, %p250
    %p252 = scmp.ne.s32.totalorder %s241, %s242
    %p253 = scmp.eq.s32.totalorder %s23, 0
    %p254 = por %p252, %p253
    %p255 = scmp.ne.s32.totalorder %s241, %s242
    %p256 = scmp.eq.s32.totalorder %s24, 1
    %p257 = por %p255, %p256
    %p259 = scmp.ne.s32.totalorder %s242, %s258
    %p260 = scmp.eq.s32.totalorder %s24, 0
    %p261 = por %p259, %p260
    %s262 = ssub.s32 %s25, %s37
    %s263 = ssub.s32 %s26, %s33
    %s264 = sor.u32 %s262, %s263
    %p265 = scmp.eq.s32.totalorder %s264, 0
    %s267 = sadd.s32 %s266, 1
    %s268 = scalar_select %p265, %s266, %s267
    %p271 = pneg %p265
    %p272 = scmp.eq.s32.totalorder %s18, 1
    %p273 = por %p271, %p272
    %p274 = scmp.ne.s32.totalorder %s266, %s269
    %p275 = scmp.eq.s32.totalorder %s18, 0
    %p276 = por %p274, %p275
    %p277 = scmp.ne.s32.totalorder %s266, %s269
    %p278 = scmp.eq.s32.totalorder %s23, 1
    %p279 = por %p277, %p278
    %p280 = scmp.ne.s32.totalorder %s269, %s270
    %p281 = scmp.eq.s32.totalorder %s23, 0
    %p282 = por %p280, %p281
    %p283 = scmp.ne.s32.totalorder %s269, %s270
    %p284 = scmp.eq.s32.totalorder %s24, 1
    %p285 = por %p283, %p284
    %p287 = scmp.ne.s32.totalorder %s270, %s286
    %p288 = scmp.eq.s32.totalorder %s24, 0
    %p289 = por %p287, %p288
    %s290 = ssub.s32 %s25, %s37
    %s291 = ssub.s32 %s26, %s33
    %s292 = sor.u32 %s290, %s291
    %p293 = scmp.eq.s32.totalorder %s292, 0
    %s295 = sadd.s32 %s294, 1
    %s296 = scalar_select %p293, %s294, %s295
    %p299 = pneg %p293
    %p300 = scmp.eq.s32.totalorder %s18, 1
    %p301 = por %p299, %p300
    %p302 = scmp.ne.s32.totalorder %s294, %s297
    %p303 = scmp.eq.s32.totalorder %s18, 0
    %p304 = por %p302, %p303
    %p305 = scmp.ne.s32.totalorder %s294, %s297
    %p306 = scmp.eq.s32.totalorder %s23, 1
    %p307 = por %p305, %p306
    %p308 = scmp.ne.s32.totalorder %s297, %s298
    %p309 = scmp.eq.s32.totalorder %s23, 0
    %p310 = por %p308, %p309
    %p311 = scmp.ne.s32.totalorder %s297, %s298
    %p312 = scmp.eq.s32.totalorder %s24, 1
    %p313 = por %p311, %p312
    %p315 = scmp.ne.s32.totalorder %s298, %s314
    %p316 = scmp.eq.s32.totalorder %s24, 0
    %p317 = por %p315, %p316
    %p318 = scmp.le.s32.totalorder 1, %s18
    %p319 = scmp.lt.s32.totalorder %s18, 3
    %p320 = pnand %p318, %p319
    %p321 = pneg %p320
    // Predicated region
    $region9: #{_lambda_.2} parent=5 // pred_check
      _
    $region10: #{_lambda_.2} parent=5 // pred_check_branch
      %323 = sbr.rel (%p320) target = $region12
    $region11: #{_lambda_.2} parent=5 // pred_region
      %s324 = ssub.s32 %s18, 1
      // Predicated region
      $region13: #{_lambda_.2} parent=11 // pred_check
        %p325 = pneg %p79
      $region14: #{_lambda_.2} parent=11 // pred_check_branch
        %327 = sbr.rel (%p325) target = $region16
      $region15: #{_lambda_.2} parent=11 // pred_region
        _
      $region16: #{_lambda_.2} parent=11 // pred_fallthru
        _
      // Predicated region
      $region17: #{_lambda_.2} parent=11 // pred_check
        %p328 = pneg %p100
      $region18: #{_lambda_.2} parent=11 // pred_check_branch
        %330 = sbr.rel (%p328) target = $region20
      $region19: #{_lambda_.2} parent=11 // pred_region
        _
      $region20: #{_lambda_.2} parent=11 // pred_fallthru
        _
      // Predicated region
      $region21: #{_lambda_.2} parent=11 // pred_check
        %p331 = pneg %p121
      $region22: #{_lambda_.2} parent=11 // pred_check_branch
        %333 = sbr.rel (%p331) target = $region24
      $region23: #{_lambda_.2} parent=11 // pred_region
        _
      $region24: #{_lambda_.2} parent=11 // pred_fallthru
        _
      // Predicated region
      $region25: #{_lambda_.2} parent=11 // pred_check
        %p334 = pneg %p142
      $region26: #{_lambda_.2} parent=11 // pred_check_branch
        %336 = sbr.rel (%p334) target = $region28
      $region27: #{_lambda_.2} parent=11 // pred_region
        _
      $region28: #{_lambda_.2} parent=11 // pred_fallthru
        _
      // Predicated region
      $region29: #{_lambda_.2} parent=11 // pred_check
        %p337 = pneg %p163
      $region30: #{_lambda_.2} parent=11 // pred_check_branch
        %339 = sbr.rel (%p337) target = $region32
      $region31: #{_lambda_.2} parent=11 // pred_region
        _
      $region32: #{_lambda_.2} parent=11 // pred_fallthru
        _
      // Predicated region
      $region33: #{_lambda_.2} parent=11 // pred_check
        %p340 = pneg %p184
      $region34: #{_lambda_.2} parent=11 // pred_check_branch
        %342 = sbr.rel (%p340) target = $region36
      $region35: #{_lambda_.2} parent=11 // pred_region
        _
      $region36: #{_lambda_.2} parent=11 // pred_fallthru
        _
      // Predicated region
      $region37: #{_lambda_.2} parent=11 // pred_check
        %p343 = pneg %p205
      $region38: #{_lambda_.2} parent=11 // pred_check_branch
        %345 = sbr.rel (%p343) target = $region40
      $region39: #{_lambda_.2} parent=11 // pred_region
        _
      $region40: #{_lambda_.2} parent=11 // pred_fallthru
        _
      // Predicated region
      $region41: #{_lambda_.2} parent=11 // pred_check
        %p346 = pneg %p226
      $region42: #{_lambda_.2} parent=11 // pred_check_branch
        %348 = sbr.rel (%p346) target = $region44
      $region43: #{_lambda_.2} parent=11 // pred_region
        _
      $region44: #{_lambda_.2} parent=11 // pred_fallthru
        _
    $region12: #{_lambda_.2} parent=5 // pred_fallthru
      _
    %p349 = scmp.lt.s32.totalorder %s18, 2
    // Predicated region
    $region45: #{_lambda_.2} parent=5 // pred_check
      %p350 = pneg %p349
    $region46: #{_lambda_.2} parent=5 // pred_check_branch
      %352 = sbr.rel (%p350) target = $region48
    $region47: #{_lambda_.2} parent=5 // pred_region
      // Predicated region
      $region49: #{_lambda_.2} parent=47 // pred_check
        %p353 = pneg %p52
      $region50: #{_lambda_.2} parent=47 // pred_check_branch
        %355 = sbr.rel (%p353) target = $region52
      $region51: #{_lambda_.2} parent=47 // pred_region
        %p356 = scmp.lt.s32.totalorder %s25, 1
        %s357 = scalar_select %p356, %s25, 1
        %p358 = scmp.lt.s32.totalorder %s26, 0
        %s359 = scalar_select %p358, %s26, 0
        %s360 = sadd.s32 %s359, %s357
        %s361 = smul.addr %s360, 4
        %s362 = scalar_lea.vmem %s0, %s361
      $region52: #{_lambda_.2} parent=47 // pred_fallthru
        _
    $region48: #{_lambda_.2} parent=5 // pred_fallthru
      _
    %p363 = scmp.le.s32.totalorder 1, %s18
    %p364 = scmp.lt.s32.totalorder %s18, 3
    %p365 = pnand %p363, %p364
    %p366 = pneg %p365
    // Predicated region
    $region53: #{_lambda_.2} parent=5 // pred_check
      _
    $region54: #{_lambda_.2} parent=5 // pred_check_branch
      %368 = sbr.rel (%p365) target = $region56
    $region55: #{_lambda_.2} parent=5 // pred_region
      %s369 = ssub.s32 %s18, 1
      %p370 = scmp.lt.s32.totalorder %s27, 1
      %s371 = scalar_select %p370, %s27, 1
      %p372 = scmp.lt.s32.totalorder %s28, 0
      %s373 = scalar_select %p372, %s28, 0
      %s374 = sadd.s32 %s373, %s371
      %s375 = smul.addr %s374, 4
      %s376 = scalar_lea.vmem %s0, %s375
      %p377 = pneg %p58
      %p378 = pneg %p55
      %p379 = pneg %p79
      %p380 = pneg %p76
      %p381 = pneg %p100
      %p382 = pneg %p97
      %p383 = pneg %p121
      %p384 = pneg %p118
      %p385 = pneg %p142
      %p386 = pneg %p139
      %p387 = pneg %p163
      %p388 = pneg %p160
      %p389 = pneg %p184
      %p390 = pneg %p181
      %p391 = pneg %p205
      %p392 = pneg %p202
      %p393 = pneg %p226
      %p394 = pneg %p223
      %p395 = pneg %p254
      %p396 = pneg %p251
      %p397 = scmp.lt.s32.totalorder %s27, 1
      %s398 = scalar_select %p397, %s27, 1
      %p399 = scmp.lt.s32.totalorder %s28, 0
      %s400 = scalar_select %p399, %s28, 0
      %s401 = smul.addr %s398, 4
      %s402 = sadd.s32 %s400, %s401
      %s403 = smul.addr %s402, 4
      %s404 = scalar_lea.vmem %s9, %s403
      %p405 = pneg %p282
      %p406 = pneg %p279
      %p407 = scmp.lt.s32.totalorder %s27, 1
      %s408 = scalar_select %p407, %s27, 1
      %p409 = scmp.lt.s32.totalorder %s28, 0
      %s410 = scalar_select %p409, %s28, 0
      %s411 = smul.addr %s408, 4
      %s412 = sadd.s32 %s410, %s411
      %s413 = smul.addr %s412, 4
      %s414 = scalar_lea.vmem %s10, %s413
      %p415 = pneg %p310
      %p416 = pneg %p307
      %p417 = scmp.lt.s32.totalorder %s27, 1
      %s418 = scalar_select %p417, %s27, 1
      %p419 = scmp.lt.s32.totalorder %s28, 0
      %s420 = scalar_select %p419, %s28, 0
      %s421 = smul.addr %s418, 4
      %s422 = sadd.s32 %s420, %s421
      %s423 = smul.addr %s422, 4
      %s424 = scalar_lea.vmem %s11, %s423
      %p425 = scmp.lt.s32.totalorder %s27, 1
      %s426 = scalar_select %p425, %s27, 1
      %p427 = scmp.lt.s32.totalorder %s28, 0
      %s428 = scalar_select %p427, %s28, 0
      %s429 = sadd.s32 %s428, %s426
      %s430 = smul.addr %s429, 4
      %s431 = scalar_lea.vmem %s0, %s430
      %p432 = scmp.lt.s32.totalorder %s27, 1
      %s433 = scalar_select %p432, %s27, 1
      %p434 = scmp.lt.s32.totalorder %s28, 0
      %s435 = scalar_select %p434, %s28, 0
      %s436 = smul.addr %s433, 4
      %s437 = sadd.s32 %s435, %s436
      %s438 = smul.addr %s437, 4
      %s439 = scalar_lea.vmem %s9, %s438
      %p440 = scmp.lt.s32.totalorder %s27, 1
      %s441 = scalar_select %p440, %s27, 1
      %p442 = scmp.lt.s32.totalorder %s28, 0
      %s443 = scalar_select %p442, %s28, 0
      %s444 = smul.addr %s441, 4
      %s445 = sadd.s32 %s443, %s444
      %s446 = smul.addr %s445, 4
      %s447 = scalar_lea.vmem %s10, %s446
      %p448 = scmp.lt.s32.totalorder %s27, 1
      %s449 = scalar_select %p448, %s27, 1
      %p450 = scmp.lt.s32.totalorder %s28, 0
      %s451 = scalar_select %p450, %s28, 0
      %s452 = smul.addr %s449, 4
      %s453 = sadd.s32 %s451, %s452
      %s454 = smul.addr %s453, 4
      %s455 = scalar_lea.vmem %s11, %s454
      %v457 = vld [vmem:[%s431] sm:$0xf]
      %v458 = vld [vmem:[%s1] sm:$0xf]
      %v459 = vld [vmem:[%s1 + $0x4] sm:$0xf]
      %v460 = vld [vmem:[%s1 + $0x8] sm:$0xf]
      %v461 = vld [vmem:[%s1 + $0xc] sm:$0xf]
      %v462 = vld [vmem:[%s2] sm:$0x1]
      %v464 = vperm.slane %v462, 0
      %v470 = vunpack.c.l.b16 %v458
      %v471 = vunpack.c.l.b16 %v459
      %v472 = vunpack.c.l.b16 %v460
      %v473 = vunpack.c.l.b16 %v461
      %v474 = vpack.c.b16 %v471, %v470
      %v475 = vpack.c.b16 %v473, %v472
      %vm478 = vcmask 261120
      %v480 = vsel %vm478, %v457, 0
      %482 = vmatpush.bf16.msra.mxu0 0
      %483 = vmatpush.bf16.msra.mxu0 0
      %484 = vmatpush.bf16.msra.mxu0 0
      %485 = vmatpush.bf16.msra.mxu0 0
      %486 = vmatpush.bf16.msra.mxu0 0
      %487 = vmatpush.bf16.msra.mxu0 0
      %488 = vmatpush.bf16.msra.mxu0 %v475
      %489 = vmatpush.bf16.msra.mxu0 %v474
      %490 = vmatmul.bf16.gmra.mxu0 %v480
      %v491 = vpop.f32.mrf.mxu0
      %v492 = vadd.f32 %v464, %v491
      %v493 = vpop.f32.mrf.mxu0
      %494 = vdwg.mxu0
      %v495 = vpack.c.bf16 %v492, %v492
      %v496 = vld [vmem:[%s3] sm:$0xf]
      %v497 = vld [vmem:[%s3 + $0x4] sm:$0xf]
      %v498 = vld [vmem:[%s3 + $0x8] sm:$0xf]
      %v499 = vld [vmem:[%s3 + $0xc] sm:$0xf]
      %v500 = vld [vmem:[%s3 + $0x10] sm:$0xf]
      %v501 = vld [vmem:[%s3 + $0x14] sm:$0xf]
      %v502 = vld [vmem:[%s3 + $0x18] sm:$0xf]
      %v503 = vld [vmem:[%s3 + $0x1c] sm:$0xf]
      %v504 = vld [vmem:[%s4] sm:$0x1]
      %v506 = vperm.slane %v504, 0
      %v516 = vunpack.c.l.b16 %v496
      %v517 = vunpack.c.l.b16 %v497
      %v518 = vunpack.c.l.b16 %v498
      %v519 = vunpack.c.l.b16 %v499
      %v520 = vunpack.c.l.b16 %v500
      %v521 = vunpack.c.l.b16 %v501
      %v522 = vunpack.c.l.b16 %v502
      %v523 = vunpack.c.l.b16 %v503
      %v524 = vpack.c.b16 %v517, %v516
      %v525 = vpack.c.b16 %v519, %v518
      %v526 = vpack.c.b16 %v521, %v520
      %v527 = vpack.c.b16 %v523, %v522
      %vm532 = vcmask 523264
      %v534 = vsel %vm532, %v495, 0
      %536 = vmatpush.bf16.msra.mxu0 0
      %537 = vmatpush.bf16.msra.mxu0 0
      %538 = vmatpush.bf16.msra.mxu0 0
      %539 = vmatpush.bf16.msra.mxu0 0
      %540 = vmatpush.bf16.msra.mxu0 %v527
      %541 = vmatpush.bf16.msra.mxu0 %v526
      %542 = vmatpush.bf16.msra.mxu0 %v525
      %543 = vmatpush.bf16.msra.mxu0 %v524
      %544 = vmatmul.bf16.gmra.mxu0 %v534
      %v545 = vpop.f32.mrf.mxu0
      %v546 = vadd.f32 %v506, %v545
      %v547 = vpop.f32.mrf.mxu0
      %548 = vdwg.mxu0
      %v549 = vpack.c.bf16 %v546, %v546
      %v550 = vld [vmem:[%s5] sm:$0xf]
      %v551 = vld [vmem:[%s5 + $0x4] sm:$0xf]
      %v552 = vld [vmem:[%s5 + $0x8] sm:$0xf]
      %v553 = vld [vmem:[%s5 + $0xc] sm:$0xf]
      %v554 = vld [vmem:[%s5 + $0x10] sm:$0xf]
      %v555 = vld [vmem:[%s5 + $0x14] sm:$0xf]
      %v556 = vld [vmem:[%s5 + $0x18] sm:$0xf]
      %v557 = vld [vmem:[%s5 + $0x1c] sm:$0xf]
      %v558 = vld [vmem:[%s6] sm:$0x1]
      %v560 = vperm.slane %v558, 0
      %v570 = vunpack.c.l.b16 %v550
      %v571 = vunpack.c.l.b16 %v551
      %v572 = vunpack.c.l.b16 %v552
      %v573 = vunpack.c.l.b16 %v553
      %v574 = vunpack.c.l.b16 %v554
      %v575 = vunpack.c.l.b16 %v555
      %v576 = vunpack.c.l.b16 %v556
      %v577 = vunpack.c.l.b16 %v557
      %v578 = vpack.c.b16 %v571, %v570
      %v579 = vpack.c.b16 %v573, %v572
      %v580 = vpack.c.b16 %v575, %v574
      %v581 = vpack.c.b16 %v577, %v576
      %586 = vmatpush.bf16.msra.mxu0 0
      %587 = vmatpush.bf16.msra.mxu0 0
      %588 = vmatpush.bf16.msra.mxu0 0
      %589 = vmatpush.bf16.msra.mxu0 0
      %590 = vmatpush.bf16.msra.mxu0 %v581
      %591 = vmatpush.bf16.msra.mxu0 %v580
      %592 = vmatpush.bf16.msra.mxu0 %v579
      %593 = vmatpush.bf16.msra.mxu0 %v578
      %594 = vmatmul.bf16.gmra.mxu0 %v534
      %v595 = vpop.f32.mrf.mxu0
      %v596 = vadd.f32 %v560, %v595
      %v597 = vpop.f32.mrf.mxu0
      %598 = vdwg.mxu0
      %v599 = vpack.c.bf16 %v596, %v596
      %v600 = vld [vmem:[%s7] sm:$0xf]
      %v601 = vld [vmem:[%s7 + $0x4] sm:$0xf]
      %v602 = vld [vmem:[%s7 + $0x8] sm:$0xf]
      %v603 = vld [vmem:[%s7 + $0xc] sm:$0xf]
      %v604 = vld [vmem:[%s7 + $0x10] sm:$0xf]
      %v605 = vld [vmem:[%s7 + $0x14] sm:$0xf]
      %v606 = vld [vmem:[%s7 + $0x18] sm:$0xf]
      %v607 = vld [vmem:[%s7 + $0x1c] sm:$0xf]
      %v608 = vld [vmem:[%s8] sm:$0x1]
      %v610 = vperm.slane %v608, 0
      %v620 = vunpack.c.l.b16 %v600
      %v621 = vunpack.c.l.b16 %v601
      %v622 = vunpack.c.l.b16 %v602
      %v623 = vunpack.c.l.b16 %v603
      %v624 = vunpack.c.l.b16 %v604
      %v625 = vunpack.c.l.b16 %v605
      %v626 = vunpack.c.l.b16 %v606
      %v627 = vunpack.c.l.b16 %v607
      %v628 = vpack.c.b16 %v621, %v620
      %v629 = vpack.c.b16 %v623, %v622
      %v630 = vpack.c.b16 %v625, %v624
      %v631 = vpack.c.b16 %v627, %v626
      %636 = vmatpush.bf16.msra.mxu0 0
      %637 = vmatpush.bf16.msra.mxu0 0
      %638 = vmatpush.bf16.msra.mxu0 0
      %639 = vmatpush.bf16.msra.mxu0 0
      %640 = vmatpush.bf16.msra.mxu0 %v631
      %641 = vmatpush.bf16.msra.mxu0 %v630
      %642 = vmatpush.bf16.msra.mxu0 %v629
      %643 = vmatpush.bf16.msra.mxu0 %v628
      %644 = vmatmul.bf16.gmra.mxu0 %v534
      %v645 = vpop.f32.mrf.mxu0
      %v646 = vadd.f32 %v610, %v645
      %v647 = vpop.f32.mrf.mxu0
      %648 = vdwg.mxu0
      %v649 = vpack.c.bf16 %v646, %v646
      %vm650 = vcmask 125952
      %651 = vst.msk [vmem:[%s439] sm:$0xf] %vm650, %v549
      %652 = vst.msk [vmem:[%s447] sm:$0xf] %vm650, %v599
      %653 = vst.msk [vmem:[%s455] sm:$0xf] %vm650, %v649
      %655 = vrot.lane.b32.xlu0 %v549, 112
      %v656 = vpop.permute.xlu0 %655
      %s658 = scalar_lea.vmem %s439, 4
      %659 = vst.msk [vmem:[%s658] sm:$0xf] %vm650, %v656
      %661 = vrot.lane.b32.xlu0 %v599, 112
      %v662 = vpop.permute.xlu0 %661
      %s664 = scalar_lea.vmem %s447, 4
      %665 = vst.msk [vmem:[%s664] sm:$0xf] %vm650, %v662
      %667 = vrot.lane.b32.xlu0 %v649, 112
      %v668 = vpop.permute.xlu0 %667
      %s670 = scalar_lea.vmem %s455, 4
      %671 = vst.msk [vmem:[%s670] sm:$0xf] %vm650, %v668
      %672 = vrot.lane.b32.xlu0 %v549, 96
      %v673 = vpop.permute.xlu0 %672
      %s675 = scalar_lea.vmem %s439, 8
      %676 = vst.msk [vmem:[%s675] sm:$0xf] %vm650, %v673
      %677 = vrot.lane.b32.xlu0 %v599, 96
      %v678 = vpop.permute.xlu0 %677
      %s680 = scalar_lea.vmem %s447, 8
      %681 = vst.msk [vmem:[%s680] sm:$0xf] %vm650, %v678
      %682 = vrot.lane.b32.xlu0 %v649, 96
      %v683 = vpop.permute.xlu0 %682
      %s685 = scalar_lea.vmem %s455, 8
      %686 = vst.msk [vmem:[%s685] sm:$0xf] %vm650, %v683
      %687 = vrot.lane.b32.xlu0 %v549, 80
      %v688 = vpop.permute.xlu0 %687
      %s690 = scalar_lea.vmem %s439, 12
      %691 = vst.msk [vmem:[%s690] sm:$0xf] %vm650, %v688
      %692 = vrot.lane.b32.xlu0 %v599, 80
      %v693 = vpop.permute.xlu0 %692
      %s695 = scalar_lea.vmem %s447, 12
      %696 = vst.msk [vmem:[%s695] sm:$0xf] %vm650, %v693
      %697 = vrot.lane.b32.xlu0 %v649, 80
      %v698 = vpop.permute.xlu0 %697
      %s700 = scalar_lea.vmem %s455, 12
      %701 = vst.msk [vmem:[%s700] sm:$0xf] %vm650, %v698
      %p702 = scmp.lt.s32.totalorder %s27, 1
      %s703 = scalar_select %p702, %s27, 1
      %p704 = scmp.lt.s32.totalorder %s28, 0
      %s705 = scalar_select %p704, %s28, 0
      %s706 = smul.addr %s703, 4
      %s707 = sadd.s32 %s705, %s706
      %s708 = smul.addr %s707, 4
      %s709 = scalar_lea.vmem %s9, %s708
      %p710 = scmp.lt.s32.totalorder %s27, 1
      %s711 = scalar_select %p710, %s27, 1
      %p712 = scmp.lt.s32.totalorder %s28, 0
      %s713 = scalar_select %p712, %s28, 0
      %s714 = smul.addr %s711, 4
      %s715 = sadd.s32 %s713, %s714
      %s716 = smul.addr %s715, 4
      %s717 = scalar_lea.vmem %s10, %s716
      %p718 = scmp.lt.s32.totalorder %s27, 1
      %s719 = scalar_select %p718, %s27, 1
      %p720 = scmp.lt.s32.totalorder %s28, 0
      %s721 = scalar_select %p720, %s28, 0
      %s722 = smul.addr %s719, 4
      %s723 = sadd.s32 %s721, %s722
      %s724 = smul.addr %s723, 4
      %s725 = scalar_lea.vmem %s11, %s724
      // Predicated region
      $region57: #{_lambda_.2} parent=55 // pred_check
        %p726 = pneg %p251
      $region58: #{_lambda_.2} parent=55 // pred_check_branch
        %728 = sbr.rel (%p726) target = $region60
      $region59: #{_lambda_.2} parent=55 // pred_region
        _
      $region60: #{_lambda_.2} parent=55 // pred_fallthru
        _
      // Predicated region
      $region61: #{_lambda_.2} parent=55 // pred_check
        %p729 = pneg %p279
      $region62: #{_lambda_.2} parent=55 // pred_check_branch
        %731 = sbr.rel (%p729) target = $region64
      $region63: #{_lambda_.2} parent=55 // pred_region
        _
      $region64: #{_lambda_.2} parent=55 // pred_fallthru
        _
      // Predicated region
      $region65: #{_lambda_.2} parent=55 // pred_check
        %p732 = pneg %p307
      $region66: #{_lambda_.2} parent=55 // pred_check_branch
        %734 = sbr.rel (%p732) target = $region68
      $region67: #{_lambda_.2} parent=55 // pred_region
        _
      $region68: #{_lambda_.2} parent=55 // pred_fallthru
        _
    $region56: #{_lambda_.2} parent=5 // pred_fallthru
      _
    %p735 = scmp.le.s32.totalorder 2, %s18
    // Predicated region
    $region69: #{_lambda_.2} parent=5 // pred_check
      %p736 = pneg %p735
    $region70: #{_lambda_.2} parent=5 // pred_check_branch
      %738 = sbr.rel (%p736) target = $region72
    $region71: #{_lambda_.2} parent=5 // pred_region
      %s739 = ssub.s32 %s18, 2
      // Predicated region
      $region73: #{_lambda_.2} parent=71 // pred_check
        %p740 = pneg %p257
      $region74: #{_lambda_.2} parent=71 // pred_check_branch
        %742 = sbr.rel (%p740) target = $region76
      $region75: #{_lambda_.2} parent=71 // pred_region
        %p743 = scmp.lt.s32.totalorder %s29, 1
        %s744 = scalar_select %p743, %s29, 1
        %p745 = scmp.lt.s32.totalorder %s30, 0
        %s746 = scalar_select %p745, %s30, 0
        %s747 = smul.addr %s744, 4
        %s748 = sadd.s32 %s746, %s747
        %s749 = smul.addr %s748, 4
        %s750 = scalar_lea.vmem %s9, %s749
      $region76: #{_lambda_.2} parent=71 // pred_fallthru
        _
      // Predicated region
      $region77: #{_lambda_.2} parent=71 // pred_check
        %p751 = pneg %p285
      $region78: #{_lambda_.2} parent=71 // pred_check_branch
        %753 = sbr.rel (%p751) target = $region80
      $region79: #{_lambda_.2} parent=71 // pred_region
        %p754 = scmp.lt.s32.totalorder %s29, 1
        %s755 = scalar_select %p754, %s29, 1
        %p756 = scmp.lt.s32.totalorder %s30, 0
        %s757 = scalar_select %p756, %s30, 0
        %s758 = smul.addr %s755, 4
        %s759 = sadd.s32 %s757, %s758
        %s760 = smul.addr %s759, 4
        %s761 = scalar_lea.vmem %s10, %s760
      $region80: #{_lambda_.2} parent=71 // pred_fallthru
        _
      // Predicated region
      $region81: #{_lambda_.2} parent=71 // pred_check
        %p762 = pneg %p313
      $region82: #{_lambda_.2} parent=71 // pred_check_branch
        %764 = sbr.rel (%p762) target = $region84
      $region83: #{_lambda_.2} parent=71 // pred_region
        %p765 = scmp.lt.s32.totalorder %s29, 1
        %s766 = scalar_select %p765, %s29, 1
        %p767 = scmp.lt.s32.totalorder %s30, 0
        %s768 = scalar_select %p767, %s30, 0
        %s769 = smul.addr %s766, 4
        %s770 = sadd.s32 %s768, %s769
        %s771 = smul.addr %s770, 4
        %s772 = scalar_lea.vmem %s11, %s771
      $region84: #{_lambda_.2} parent=71 // pred_fallthru
        _
    $region72: #{_lambda_.2} parent=5 // pred_fallthru
      _
  $region6: #{_lambda_.2} parent=0 // loop_footer
    %s22 = sadd.s32 1, %s18
  $region7: #{_lambda_.2} parent=0 // loop_footer_branch
    %17 = sbr.rel target = $region3
  $region8: #{_lambda_.2} parent=0 // loop_exit
    _

// kernel: _lambda_.3
$region0: #{_lambda_.3}
  #allocation0 [shape = 'u32[]', space=smem, size = 0x4, offset = 0x4, fixed_abs, tag = 'smem constant byte address 0x4 - core index']
  #allocation1 [shape = 'u32[72,128]{1,0:T(1,128)}', space=vmem, size = 0x9000, scoped, tag = 'internal scratch']
  #allocation2 [shape = 'bf16[8,64]{1,0:T(8,128)(2,1)}', space=vmem, size = 0x800, scoped, tag = 'scratch operand']
  %s0 = inlined_call_operand.vmem [shape: bf16[2,4,8,16], index: 0, kind: input, shape index: {}]
  %s1 = inlined_call_operand.vmem [shape: bf16[2,4,8,16], index: 1, kind: input, shape index: {}]
  %s2 = inlined_call_operand.vmem [shape: bf16[2,4,8,16], index: 2, kind: input, shape index: {}]
  %s3 = inlined_call_operand.vmem [shape: bf16[64,64], index: 3, kind: input, shape index: {}]
  %s4 = inlined_call_operand.vmem [shape: f32[1,64], index: 4, kind: input, shape index: {}]
  %s5 = inlined_call_operand.vmem [shape: bf16[64,64], index: 5, kind: input, shape index: {}]
  %s6 = inlined_call_operand.vmem [shape: f32[1,64], index: 6, kind: input, shape index: {}]
  %s7 = inlined_call_operand.vmem [shape: bf16[64,64], index: 7, kind: input, shape index: {}]
  %s8 = inlined_call_operand.vmem [shape: f32[1,64], index: 8, kind: input, shape index: {}]
  %s9 = inlined_call_operand.vmem [shape: bf16[64,128], index: 9, kind: input, shape index: {}]
  %s10 = inlined_call_operand.vmem [shape: f32[1,128], index: 10, kind: input, shape index: {}]
  %s11 = inlined_call_operand.hbm [shape: bf16[2,8,128], index: 11, kind: output, shape index: {}]
  %s12 = sld [smem:[#allocation0]]
  $region81: #{_lambda_.3} parent=0
    _
  %s14 = ssub.s32 1, %s12
  %s15 = scalar_select 0, %s14, %s12
  $region1: #{_lambda_.3} parent=0
    #allocation3 [shape = 'u8[4096]{0}', space=vmem, size = 0x1000, scoped, tag = 'output window, operand 0']
    #allocation4 [shape = 's32[2]{0}', space=sflag, size = 0x8, scoped, tag = 'scoped memory for _lambda_.3']
    %16 = vsyncpa [#allocation4], 0
    %s17 = scalar_lea.sflag [#allocation4], 1
    %18 = vsyncpa %s17, 0
    loop: start=0, step=1, limit=4
    $region2: #{_lambda_.3} parent=1 // loop_pre_header
      _
    $region3: #{_lambda_.3} parent=1 // loop_header
      %s20 = sphi 0, %s24
      %p21 = scmp.ge.s32.totalorder %s20, 4
      %s27 = sphi 0, %s46
      %s28 = sphi 0, %s42
      %s29 = sphi 0, %s38
      %s30 = sphi 0, %s27
      %s31 = sphi 0, %s28
      %s32 = sphi 0, %s29
      %s33 = sphi 0, %s30
      %s34 = sphi 0, %s31
      %s35 = sphi 0, %s32
      %s51 = sphi 0, %s53
      %s54 = sphi 0, %s51
      %s55 = sphi 0, %s54
      %s71 = sphi 0, %s55
      %s77 = sphi 0, %s79
      %s80 = sphi 0, %s77
      %s81 = sphi 0, %s80
      %s97 = sphi 0, %s81
      %s103 = sphi 0, %s105
      %s106 = sphi 0, %s103
      %s107 = sphi 0, %s106
      %s123 = sphi 0, %s107
      %s127 = sphi 0, %s127
      %s129 = sphi 0, %s127
      %s130 = sphi 0, %s129
      %s144 = sphi 0, %s130
      %s148 = sphi 0, %s148
      %s150 = sphi 0, %s148
      %s151 = sphi 0, %s150
      %s165 = sphi 0, %s151
      %s169 = sphi 0, %s169
      %s171 = sphi 0, %s169
      %s172 = sphi 0, %s171
      %s186 = sphi 0, %s172
      %s190 = sphi 0, %s190
      %s192 = sphi 0, %s190
      %s193 = sphi 0, %s192
      %s207 = sphi 0, %s193
      %s211 = sphi 0, %s211
      %s213 = sphi 0, %s211
      %s214 = sphi 0, %s213
      %s228 = sphi 0, %s214
      %s232 = sphi 0, %s232
      %s234 = sphi 0, %s232
      %s235 = sphi 0, %s234
      %s249 = sphi 0, %s235
      %s255 = sphi 0, %s257
      %s258 = sphi 0, %s255
      %s259 = sphi 0, %s258
      %s275 = sphi 0, %s259
      %s281 = sphi 0, %s283
      %s284 = sphi 0, %s281
      %s285 = sphi 0, %s284
      %s301 = sphi 0, %s285
      %s311 = sphi 0, %s313
      %s314 = sphi 0, %s311
      %s315 = sphi 0, %s314
      %s331 = sphi 0, %s315
    $region4: #{_lambda_.3} parent=1 // loop_header_branch
      %23 = sbr.rel (%p21) target = $region8
    $region5: #{_lambda_.3} parent=1 // loop_body
      %s25 = ssub.s32 %s20, 1
      %s26 = ssub.s32 %s20, 2
      %s36 = sadd.s32 1, %s29
      %p37 = scmp.ge.s32.totalorder %s36, 1
      %s38 = scalar_select %p37, 0, %s36
      %s39 = sadd.s32 1, %s28
      %s40 = scalar_select %p37, %s39, %s28
      %p41 = scmp.ge.s32.totalorder %s40, 1
      %s42 = scalar_select %p41, 0, %s40
      %s43 = sadd.s32 1, %s27
      %s44 = scalar_select %p41, %s43, %s27
      %p45 = scmp.ge.s32.totalorder %s44, 2
      %s46 = scalar_select %p45, 0, %s44
      %s47 = ssub.s32 %s27, %s46
      %s48 = ssub.s32 %s28, %s42
      %s49 = sor.u32 %s47, %s48
      %p50 = scmp.eq.s32.totalorder %s49, 0
      %s52 = sadd.s32 %s51, 1
      %s53 = scalar_select %p50, %s51, %s52
      %p56 = pneg %p50
      %p57 = scmp.eq.s32.totalorder %s20, 1
      %p58 = por %p56, %p57
      %p59 = scmp.ne.s32.totalorder %s51, %s54
      %p60 = scmp.eq.s32.totalorder %s20, 0
      %p61 = por %p59, %p60
      %p62 = scmp.ne.s32.totalorder %s51, %s54
      %p63 = scmp.eq.s32.totalorder %s25, 1
      %p64 = por %p62, %p63
      %p65 = scmp.ne.s32.totalorder %s54, %s55
      %p66 = scmp.eq.s32.totalorder %s25, 0
      %p67 = por %p65, %p66
      %p68 = scmp.ne.s32.totalorder %s54, %s55
      %p69 = scmp.eq.s32.totalorder %s26, 1
      %p70 = por %p68, %p69
      %p72 = scmp.ne.s32.totalorder %s55, %s71
      %p73 = scmp.eq.s32.totalorder %s26, 0
      %p74 = por %p72, %p73
      %s75 = ssub.s32 %s27, %s46
      %p76 = scmp.eq.s32.totalorder %s75, 0
      %s78 = sadd.s32 %s77, 1
      %s79 = scalar_select %p76, %s77, %s78
      %p82 = pneg %p76
      %p83 = scmp.eq.s32.totalorder %s20, 1
      %p84 = por %p82, %p83
      %p85 = scmp.ne.s32.totalorder %s77, %s80
      %p86 = scmp.eq.s32.totalorder %s20, 0
      %p87 = por %p85, %p86
      %p88 = scmp.ne.s32.totalorder %s77, %s80
      %p89 = scmp.eq.s32.totalorder %s25, 1
      %p90 = por %p88, %p89
      %p91 = scmp.ne.s32.totalorder %s80, %s81
      %p92 = scmp.eq.s32.totalorder %s25, 0
      %p93 = por %p91, %p92
      %p94 = scmp.ne.s32.totalorder %s80, %s81
      %p95 = scmp.eq.s32.totalorder %s26, 1
      %p96 = por %p94, %p95
      %p98 = scmp.ne.s32.totalorder %s81, %s97
      %p99 = scmp.eq.s32.totalorder %s26, 0
      %p100 = por %p98, %p99
      %s101 = ssub.s32 %s27, %s46
      %p102 = scmp.eq.s32.totalorder %s101, 0
      %s104 = sadd.s32 %s103, 1
      %s105 = scalar_select %p102, %s103, %s104
      %p108 = pneg %p102
      %p109 = scmp.eq.s32.totalorder %s20, 1
      %p110 = por %p108, %p109
      %p111 = scmp.ne.s32.totalorder %s103, %s106
      %p112 = scmp.eq.s32.totalorder %s20, 0
      %p113 = por %p111, %p112
      %p114 = scmp.ne.s32.totalorder %s103, %s106
      %p115 = scmp.eq.s32.totalorder %s25, 1
      %p116 = por %p114, %p115
      %p117 = scmp.ne.s32.totalorder %s106, %s107
      %p118 = scmp.eq.s32.totalorder %s25, 0
      %p119 = por %p117, %p118
      %p120 = scmp.ne.s32.totalorder %s106, %s107
      %p121 = scmp.eq.s32.totalorder %s26, 1
      %p122 = por %p120, %p121
      %p124 = scmp.ne.s32.totalorder %s107, %s123
      %p125 = scmp.eq.s32.totalorder %s26, 0
      %p126 = por %p124, %p125
      %s128 = sadd.s32 %s127, 1
      %p131 = scmp.eq.s32.totalorder %s20, 1
      %p132 = scmp.ne.s32.totalorder %s127, %s129
      %p133 = scmp.eq.s32.totalorder %s20, 0
      %p134 = por %p132, %p133
      %p135 = scmp.ne.s32.totalorder %s127, %s129
      %p136 = scmp.eq.s32.totalorder %s25, 1
      %p137 = por %p135, %p136
      %p138 = scmp.ne.s32.totalorder %s129, %s130
      %p139 = scmp.eq.s32.totalorder %s25, 0
      %p140 = por %p138, %p139
      %p141 = scmp.ne.s32.totalorder %s129, %s130
      %p142 = scmp.eq.s32.totalorder %s26, 1
      %p143 = por %p141, %p142
      %p145 = scmp.ne.s32.totalorder %s130, %s144
      %p146 = scmp.eq.s32.totalorder %s26, 0
      %p147 = por %p145, %p146
      %s149 = sadd.s32 %s148, 1
      %p152 = scmp.eq.s32.totalorder %s20, 1
      %p153 = scmp.ne.s32.totalorder %s148, %s150
      %p154 = scmp.eq.s32.totalorder %s20, 0
      %p155 = por %p153, %p154
      %p156 = scmp.ne.s32.totalorder %s148, %s150
      %p157 = scmp.eq.s32.totalorder %s25, 1
      %p158 = por %p156, %p157
      %p159 = scmp.ne.s32.totalorder %s150, %s151
      %p160 = scmp.eq.s32.totalorder %s25, 0
      %p161 = por %p159, %p160
      %p162 = scmp.ne.s32.totalorder %s150, %s151
      %p163 = scmp.eq.s32.totalorder %s26, 1
      %p164 = por %p162, %p163
      %p166 = scmp.ne.s32.totalorder %s151, %s165
      %p167 = scmp.eq.s32.totalorder %s26, 0
      %p168 = por %p166, %p167
      %s170 = sadd.s32 %s169, 1
      %p173 = scmp.eq.s32.totalorder %s20, 1
      %p174 = scmp.ne.s32.totalorder %s169, %s171
      %p175 = scmp.eq.s32.totalorder %s20, 0
      %p176 = por %p174, %p175
      %p177 = scmp.ne.s32.totalorder %s169, %s171
      %p178 = scmp.eq.s32.totalorder %s25, 1
      %p179 = por %p177, %p178
      %p180 = scmp.ne.s32.totalorder %s171, %s172
      %p181 = scmp.eq.s32.totalorder %s25, 0
      %p182 = por %p180, %p181
      %p183 = scmp.ne.s32.totalorder %s171, %s172
      %p184 = scmp.eq.s32.totalorder %s26, 1
      %p185 = por %p183, %p184
      %p187 = scmp.ne.s32.totalorder %s172, %s186
      %p188 = scmp.eq.s32.totalorder %s26, 0
      %p189 = por %p187, %p188
      %s191 = sadd.s32 %s190, 1
      %p194 = scmp.eq.s32.totalorder %s20, 1
      %p195 = scmp.ne.s32.totalorder %s190, %s192
      %p196 = scmp.eq.s32.totalorder %s20, 0
      %p197 = por %p195, %p196
      %p198 = scmp.ne.s32.totalorder %s190, %s192
      %p199 = scmp.eq.s32.totalorder %s25, 1
      %p200 = por %p198, %p199
      %p201 = scmp.ne.s32.totalorder %s192, %s193
      %p202 = scmp.eq.s32.totalorder %s25, 0
      %p203 = por %p201, %p202
      %p204 = scmp.ne.s32.totalorder %s192, %s193
      %p205 = scmp.eq.s32.totalorder %s26, 1
      %p206 = por %p204, %p205
      %p208 = scmp.ne.s32.totalorder %s193, %s207
      %p209 = scmp.eq.s32.totalorder %s26, 0
      %p210 = por %p208, %p209
      %s212 = sadd.s32 %s211, 1
      %p215 = scmp.eq.s32.totalorder %s20, 1
      %p216 = scmp.ne.s32.totalorder %s211, %s213
      %p217 = scmp.eq.s32.totalorder %s20, 0
      %p218 = por %p216, %p217
      %p219 = scmp.ne.s32.totalorder %s211, %s213
      %p220 = scmp.eq.s32.totalorder %s25, 1
      %p221 = por %p219, %p220
      %p222 = scmp.ne.s32.totalorder %s213, %s214
      %p223 = scmp.eq.s32.totalorder %s25, 0
      %p224 = por %p222, %p223
      %p225 = scmp.ne.s32.totalorder %s213, %s214
      %p226 = scmp.eq.s32.totalorder %s26, 1
      %p227 = por %p225, %p226
      %p229 = scmp.ne.s32.totalorder %s214, %s228
      %p230 = scmp.eq.s32.totalorder %s26, 0
      %p231 = por %p229, %p230
      %s233 = sadd.s32 %s232, 1
      %p236 = scmp.eq.s32.totalorder %s20, 1
      %p237 = scmp.ne.s32.totalorder %s232, %s234
      %p238 = scmp.eq.s32.totalorder %s20, 0
      %p239 = por %p237, %p238
      %p240 = scmp.ne.s32.totalorder %s232, %s234
      %p241 = scmp.eq.s32.totalorder %s25, 1
      %p242 = por %p240, %p241
      %p243 = scmp.ne.s32.totalorder %s234, %s235
      %p244 = scmp.eq.s32.totalorder %s25, 0
      %p245 = por %p243, %p244
      %p246 = scmp.ne.s32.totalorder %s234, %s235
      %p247 = scmp.eq.s32.totalorder %s26, 1
      %p248 = por %p246, %p247
      %p250 = scmp.ne.s32.totalorder %s235, %s249
      %p251 = scmp.eq.s32.totalorder %s26, 0
      %p252 = por %p250, %p251
      %s253 = ssub.s32 %s29, %s38
      %p254 = scmp.eq.s32.totalorder %s253, 0
      %s256 = sadd.s32 %s255, 1
      %s257 = scalar_select %p254, %s255, %s256
      %p260 = pneg %p254
      %p261 = scmp.eq.s32.totalorder %s20, 1
      %p262 = por %p260, %p261
      %p263 = scmp.ne.s32.totalorder %s255, %s258
      %p264 = scmp.eq.s32.totalorder %s20, 0
      %p265 = por %p263, %p264
      %p266 = scmp.ne.s32.totalorder %s255, %s258
      %p267 = scmp.eq.s32.totalorder %s25, 1
      %p268 = por %p266, %p267
      %p269 = scmp.ne.s32.totalorder %s258, %s259
      %p270 = scmp.eq.s32.totalorder %s25, 0
      %p271 = por %p269, %p270
      %p272 = scmp.ne.s32.totalorder %s258, %s259
      %p273 = scmp.eq.s32.totalorder %s26, 1
      %p274 = por %p272, %p273
      %p276 = scmp.ne.s32.totalorder %s259, %s275
      %p277 = scmp.eq.s32.totalorder %s26, 0
      %p278 = por %p276, %p277
      %s279 = ssub.s32 %s29, %s38
      %p280 = scmp.eq.s32.totalorder %s279, 0
      %s282 = sadd.s32 %s281, 1
      %s283 = scalar_select %p280, %s281, %s282
      %p286 = pneg %p280
      %p287 = scmp.eq.s32.totalorder %s20, 1
      %p288 = por %p286, %p287
      %p289 = scmp.ne.s32.totalorder %s281, %s284
      %p290 = scmp.eq.s32.totalorder %s20, 0
      %p291 = por %p289, %p290
      %p292 = scmp.ne.s32.totalorder %s281, %s284
      %p293 = scmp.eq.s32.totalorder %s25, 1
      %p294 = por %p292, %p293
      %p295 = scmp.ne.s32.totalorder %s284, %s285
      %p296 = scmp.eq.s32.totalorder %s25, 0
      %p297 = por %p295, %p296
      %p298 = scmp.ne.s32.totalorder %s284, %s285
      %p299 = scmp.eq.s32.totalorder %s26, 1
      %p300 = por %p298, %p299
      %p302 = scmp.ne.s32.totalorder %s285, %s301
      %p303 = scmp.eq.s32.totalorder %s26, 0
      %p304 = por %p302, %p303
      %s305 = ssub.s32 %s27, %s46
      %s306 = ssub.s32 %s28, %s42
      %s307 = sor.u32 %s305, %s306
      %s308 = ssub.s32 %s29, %s38
      %s309 = sor.u32 %s307, %s308
      %p310 = scmp.eq.s32.totalorder %s309, 0
      %s312 = sadd.s32 %s311, 1
      %s313 = scalar_select %p310, %s311, %s312
      %p316 = pneg %p310
      %p317 = scmp.eq.s32.totalorder %s20, 1
      %p318 = por %p316, %p317
      %p319 = scmp.ne.s32.totalorder %s311, %s314
      %p320 = scmp.eq.s32.totalorder %s20, 0
      %p321 = por %p319, %p320
      %p322 = scmp.ne.s32.totalorder %s311, %s314
      %p323 = scmp.eq.s32.totalorder %s25, 1
      %p324 = por %p322, %p323
      %p325 = scmp.ne.s32.totalorder %s314, %s315
      %p326 = scmp.eq.s32.totalorder %s25, 0
      %p327 = por %p325, %p326
      %p328 = scmp.ne.s32.totalorder %s314, %s315
      %p329 = scmp.eq.s32.totalorder %s26, 1
      %p330 = por %p328, %p329
      %p332 = scmp.ne.s32.totalorder %s315, %s331
      %p333 = scmp.eq.s32.totalorder %s26, 0
      %p334 = por %p332, %p333
      %p335 = scmp.le.s32.totalorder 1, %s20
      %p336 = scmp.lt.s32.totalorder %s20, 3
      %p337 = pnand %p335, %p336
      %p338 = pneg %p337
      // Predicated region
      $region9: #{_lambda_.3} parent=5 // pred_check
        _
      $region10: #{_lambda_.3} parent=5 // pred_check_branch
        %340 = sbr.rel (%p337) target = $region12
      $region11: #{_lambda_.3} parent=5 // pred_region
        %s341 = ssub.s32 %s20, 1
        // Predicated region
        $region13: #{_lambda_.3} parent=11 // pred_check
          %p342 = pneg %p140
        $region14: #{_lambda_.3} parent=11 // pred_check_branch
          %344 = sbr.rel (%p342) target = $region16
        $region15: #{_lambda_.3} parent=11 // pred_region
          _
        $region16: #{_lambda_.3} parent=11 // pred_fallthru
          _
        // Predicated region
        $region17: #{_lambda_.3} parent=11 // pred_check
          %p345 = pneg %p161
        $region18: #{_lambda_.3} parent=11 // pred_check_branch
          %347 = sbr.rel (%p345) target = $region20
        $region19: #{_lambda_.3} parent=11 // pred_region
          _
        $region20: #{_lambda_.3} parent=11 // pred_fallthru
          _
        // Predicated region
        $region21: #{_lambda_.3} parent=11 // pred_check
          %p348 = pneg %p182
        $region22: #{_lambda_.3} parent=11 // pred_check_branch
          %350 = sbr.rel (%p348) target = $region24
        $region23: #{_lambda_.3} parent=11 // pred_region
          _
        $region24: #{_lambda_.3} parent=11 // pred_fallthru
          _
        // Predicated region
        $region25: #{_lambda_.3} parent=11 // pred_check
          %p351 = pneg %p203
        $region26: #{_lambda_.3} parent=11 // pred_check_branch
          %353 = sbr.rel (%p351) target = $region28
        $region27: #{_lambda_.3} parent=11 // pred_region
          _
        $region28: #{_lambda_.3} parent=11 // pred_fallthru
          _
        // Predicated region
        $region29: #{_lambda_.3} parent=11 // pred_check
          %p354 = pneg %p224
        $region30: #{_lambda_.3} parent=11 // pred_check_branch
          %356 = sbr.rel (%p354) target = $region32
        $region31: #{_lambda_.3} parent=11 // pred_region
          _
        $region32: #{_lambda_.3} parent=11 // pred_fallthru
          _
        // Predicated region
        $region33: #{_lambda_.3} parent=11 // pred_check
          %p357 = pneg %p245
        $region34: #{_lambda_.3} parent=11 // pred_check_branch
          %359 = sbr.rel (%p357) target = $region36
        $region35: #{_lambda_.3} parent=11 // pred_region
          _
        $region36: #{_lambda_.3} parent=11 // pred_fallthru
          _
        // Predicated region
        $region37: #{_lambda_.3} parent=11 // pred_check
          %p360 = pneg %p271
        $region38: #{_lambda_.3} parent=11 // pred_check_branch
          %362 = sbr.rel (%p360) target = $region40
        $region39: #{_lambda_.3} parent=11 // pred_region
          %p363 = scmp.lt.s32.totalorder %s32, 0
          %s364 = scalar_select %p363, %s32, 0
          %s365 = smul.addr %s364, 4
          %s366 = scalar_lea.vmem %s9, %s365
        $region40: #{_lambda_.3} parent=11 // pred_fallthru
          _
        // Predicated region
        $region41: #{_lambda_.3} parent=11 // pred_check
          %p367 = pneg %p297
        $region42: #{_lambda_.3} parent=11 // pred_check_branch
          %369 = sbr.rel (%p367) target = $region44
        $region43: #{_lambda_.3} parent=11 // pred_region
          %p370 = scmp.lt.s32.totalorder %s32, 0
          %s371 = scalar_select %p370, %s32, 0
          %s372 = scalar_lea.vmem %s10, %s371
        $region44: #{_lambda_.3} parent=11 // pred_fallthru
          _
      $region12: #{_lambda_.3} parent=5 // pred_fallthru
        _
      %p373 = scmp.lt.s32.totalorder %s20, 2
      // Predicated region
      $region45: #{_lambda_.3} parent=5 // pred_check
        %p374 = pneg %p373
      $region46: #{_lambda_.3} parent=5 // pred_check_branch
        %376 = sbr.rel (%p374) target = $region48
      $region47: #{_lambda_.3} parent=5 // pred_region
        // Predicated region
        $region49: #{_lambda_.3} parent=47 // pred_check
          %p377 = pneg %p61
        $region50: #{_lambda_.3} parent=47 // pred_check_branch
          %379 = sbr.rel (%p377) target = $region52
        $region51: #{_lambda_.3} parent=47 // pred_region
          %p380 = scmp.lt.s32.totalorder %s27, 1
          %s381 = scalar_select %p380, %s27, 1
          %p382 = scmp.lt.s32.totalorder %s28, 0
          %s383 = scalar_select %p382, %s28, 0
          %s384 = smul.addr %s381, 4
          %s385 = sadd.s32 %s383, %s384
          %s386 = smul.addr %s385, 4
          %s387 = scalar_lea.vmem %s0, %s386
        $region52: #{_lambda_.3} parent=47 // pred_fallthru
          _
        // Predicated region
        $region53: #{_lambda_.3} parent=47 // pred_check
          %p388 = pneg %p87
        $region54: #{_lambda_.3} parent=47 // pred_check_branch
          %390 = sbr.rel (%p388) target = $region56
        $region55: #{_lambda_.3} parent=47 // pred_region
          %p391 = scmp.lt.s32.totalorder %s27, 1
          %s392 = scalar_select %p391, %s27, 1
          %s393 = smul.addr %s392, 4
          %s394 = smul.addr %s393, 4
          %s395 = scalar_lea.vmem %s1, %s394
        $region56: #{_lambda_.3} parent=47 // pred_fallthru
          _
        // Predicated region
        $region57: #{_lambda_.3} parent=47 // pred_check
          %p396 = pneg %p113
        $region58: #{_lambda_.3} parent=47 // pred_check_branch
          %398 = sbr.rel (%p396) target = $region60
        $region59: #{_lambda_.3} parent=47 // pred_region
          %p399 = scmp.lt.s32.totalorder %s27, 1
          %s400 = scalar_select %p399, %s27, 1
          %s401 = smul.addr %s400, 4
          %s402 = smul.addr %s401, 4
          %s403 = scalar_lea.vmem %s2, %s402
        $region60: #{_lambda_.3} parent=47 // pred_fallthru
          _
      $region48: #{_lambda_.3} parent=5 // pred_fallthru
        _
      %p404 = scmp.le.s32.totalorder 1, %s20
      %p405 = scmp.lt.s32.totalorder %s20, 3
      %p406 = pnand %p404, %p405
      %p407 = pneg %p406
      // Predicated region
      $region61: #{_lambda_.3} parent=5 // pred_check
        _
      $region62: #{_lambda_.3} parent=5 // pred_check_branch
        %409 = sbr.rel (%p406) target = $region64
      $region63: #{_lambda_.3} parent=5 // pred_region
        %s410 = ssub.s32 %s20, 1
        %p411 = scmp.lt.s32.totalorder %s30, 1
        %s412 = scalar_select %p411, %s30, 1
        %p413 = scmp.lt.s32.totalorder %s31, 0
        %s414 = scalar_select %p413, %s31, 0
        %s415 = smul.addr %s412, 4
        %s416 = sadd.s32 %s414, %s415
        %s417 = smul.addr %s416, 4
        %s418 = scalar_lea.vmem %s0, %s417
        %p419 = pneg %p67
        %p420 = pneg %p64
        %p421 = scmp.lt.s32.totalorder %s30, 1
        %s422 = scalar_select %p421, %s30, 1
        %s423 = smul.addr %s422, 4
        %s424 = smul.addr %s423, 4
        %s425 = scalar_lea.vmem %s1, %s424
        %p426 = pneg %p93
        %p427 = pneg %p90
        %p428 = scmp.lt.s32.totalorder %s30, 1
        %s429 = scalar_select %p428, %s30, 1
        %s430 = smul.addr %s429, 4
        %s431 = smul.addr %s430, 4
        %s432 = scalar_lea.vmem %s2, %s431
        %p433 = pneg %p119
        %p434 = pneg %p116
        %p435 = pneg %p140
        %p436 = pneg %p137
        %p437 = pneg %p161
        %p438 = pneg %p158
        %p439 = pneg %p182
        %p440 = pneg %p179
        %p441 = pneg %p203
        %p442 = pneg %p200
        %p443 = pneg %p224
        %p444 = pneg %p221
        %p445 = pneg %p245
        %p446 = pneg %p242
        %p447 = scmp.lt.s32.totalorder %s32, 0
        %s448 = scalar_select %p447, %s32, 0
        %s449 = smul.addr %s448, 4
        %s450 = scalar_lea.vmem %s9, %s449
        %p451 = pneg %p271
        %p452 = pneg %p268
        %p453 = scmp.lt.s32.totalorder %s32, 0
        %s454 = scalar_select %p453, %s32, 0
        %s455 = scalar_lea.vmem %s10, %s454
        %p456 = pneg %p297
        %p457 = pneg %p294
        %p458 = pneg %p327
        %p459 = pneg %p324
        %s460 = sand.u32 %s314, 1
        %s461 = scalar_lea.sflag [#allocation4], %s460
        %s462 = sand.u32 %s314, 1
        %s463 = smul.addr %s462, 4
        %s464 = scalar_lea.vmem [#allocation3], %s463
        %p465 = scmp.lt.s32.totalorder %s30, 1
        %s466 = scalar_select %p465, %s30, 1
        %p467 = scmp.lt.s32.totalorder %s31, 0
        %s468 = scalar_select %p467, %s31, 0
        %s469 = smul.addr %s466, 4
        %s470 = sadd.s32 %s468, %s469
        %s471 = smul.addr %s470, 4
        %s472 = scalar_lea.vmem %s0, %s471
        %p473 = scmp.lt.s32.totalorder %s30, 1
        %s474 = scalar_select %p473, %s30, 1
        %s475 = smul.addr %s474, 4
        %s476 = smul.addr %s475, 4
        %s477 = scalar_lea.vmem %s1, %s476
        %p478 = scmp.lt.s32.totalorder %s30, 1
        %s479 = scalar_select %p478, %s30, 1
        %s480 = smul.addr %s479, 4
        %s481 = smul.addr %s480, 4
        %s482 = scalar_lea.vmem %s2, %s481
        %p483 = scmp.lt.s32.totalorder %s32, 0
        %s484 = scalar_select %p483, %s32, 0
        %s485 = smul.addr %s484, 4
        %s486 = scalar_lea.vmem %s9, %s485
        %p487 = scmp.lt.s32.totalorder %s32, 0
        %s488 = scalar_select %p487, %s32, 0
        %s489 = scalar_lea.vmem %s10, %s488
        %p491 = scmp.eq.s32.totalorder %s32, 0
        // Predicated region
        $region65: #{_lambda_.3} parent=63 // pred_check
          %p492 = pneg %p491
        $region66: #{_lambda_.3} parent=63 // pred_check_branch
          %494 = sbr.rel (%p492) target = $region68
        $region67: #{_lambda_.3} parent=63 // pred_region
          %v495 = vld [vmem:[%s472] sm:$0xf]
          %v496 = vld [vmem:[%s472 + $0x4] sm:$0xf]
          %v497 = vld [vmem:[%s472 + $0x8] sm:$0xf]
          %v498 = vld [vmem:[%s472 + $0xc] sm:$0xf]
          %v499 = vld [vmem:[%s477] sm:$0xf]
          %v500 = vld [vmem:[%s477 + $0x4] sm:$0xf]
          %v501 = vld [vmem:[%s477 + $0x8] sm:$0xf]
          %v502 = vld [vmem:[%s477 + $0xc] sm:$0xf]
          %v503 = vld [vmem:[%s482] sm:$0xf]
          %v504 = vld [vmem:[%s482 + $0x4] sm:$0xf]
          %v505 = vld [vmem:[%s482 + $0x8] sm:$0xf]
          %v506 = vld [vmem:[%s482 + $0xc] sm:$0xf]
          %vm507 = vcmask 130048
          %v509 = vsel %vm507, %v495, 0
          %v512 = vsel %vm507, %v499, 0
          %514 = vmatpush.bf16.xpose.msra.mxu0 0
          %515 = vmatpush.bf16.xpose.msra.mxu0 0
          %516 = vmatpush.bf16.xpose.msra.mxu0 0
          %517 = vmatpush.bf16.xpose.msra.mxu0 0
          %518 = vmatpush.bf16.xpose.msra.mxu0 0
          %519 = vmatpush.bf16.xpose.msra.mxu0 0
          %520 = vmatpush.bf16.xpose.msra.mxu0 0
          %521 = vmatpush.bf16.xpose.msra.mxu0 %v512
          %522 = vmatmul.bf16.gmra.mxu0 %v509
          %v523 = vpop.f32.mrf.mxu0
          %v524 = vadd.f32 0.0, %v523
          %v525 = vpop.f32.mrf.mxu0
          %526 = vdwg.mxu0
          %v528 = vsel %vm507, %v496, 0
          %v531 = vsel %vm507, %v500, 0
          %533 = vmatpush.bf16.xpose.msra.mxu0 0
          %534 = vmatpush.bf16.xpose.msra.mxu0 0
          %535 = vmatpush.bf16.xpose.msra.mxu0 0
          %536 = vmatpush.bf16.xpose.msra.mxu0 0
          %537 = vmatpush.bf16.xpose.msra.mxu0 0
          %538 = vmatpush.bf16.xpose.msra.mxu0 0
          %539 = vmatpush.bf16.xpose.msra.mxu0 0
          %540 = vmatpush.bf16.xpose.msra.mxu0 %v531
          %541 = vmatmul.bf16.gmra.mxu0 %v528
          %v542 = vpop.f32.mrf.mxu0
          %v543 = vadd.f32 0.0, %v542
          %v544 = vpop.f32.mrf.mxu0
          %545 = vdwg.mxu0
          %v547 = vsel %vm507, %v497, 0
          %v550 = vsel %vm507, %v501, 0
          %552 = vmatpush.bf16.xpose.msra.mxu0 0
          %553 = vmatpush.bf16.xpose.msra.mxu0 0
          %554 = vmatpush.bf16.xpose.msra.mxu0 0
          %555 = vmatpush.bf16.xpose.msra.mxu0 0
          %556 = vmatpush.bf16.xpose.msra.mxu0 0
          %557 = vmatpush.bf16.xpose.msra.mxu0 0
          %558 = vmatpush.bf16.xpose.msra.mxu0 0
          %559 = vmatpush.bf16.xpose.msra.mxu0 %v550
          %560 = vmatmul.bf16.gmra.mxu0 %v547
          %v561 = vpop.f32.mrf.mxu0
          %v562 = vadd.f32 0.0, %v561
          %v563 = vpop.f32.mrf.mxu0
          %564 = vdwg.mxu0
          %v566 = vsel %vm507, %v498, 0
          %v569 = vsel %vm507, %v502, 0
          %571 = vmatpush.bf16.xpose.msra.mxu0 0
          %572 = vmatpush.bf16.xpose.msra.mxu0 0
          %573 = vmatpush.bf16.xpose.msra.mxu0 0
          %574 = vmatpush.bf16.xpose.msra.mxu0 0
          %575 = vmatpush.bf16.xpose.msra.mxu0 0
          %576 = vmatpush.bf16.xpose.msra.mxu0 0
          %577 = vmatpush.bf16.xpose.msra.mxu0 0
          %578 = vmatpush.bf16.xpose.msra.mxu0 %v569
          %579 = vmatmul.bf16.gmra.mxu0 %v566
          %v580 = vpop.f32.mrf.mxu0
          %v581 = vadd.f32 0.0, %v580
          %v582 = vpop.f32.mrf.mxu0
          %583 = vdwg.mxu0
          %vm584 = vcmask 64512
          %v585 = vsel %vm584, %v524, -inf
          %586 = vmax.xlane.f32.xlu0 %v585
          %v587 = vpop.xlane.xlu0 %586
          %v588 = vsel %vm584, %v543, -inf
          %589 = vmax.xlane.f32.xlu0 %v588
          %v590 = vpop.xlane.xlu0 %589
          %v591 = vsel %vm584, %v562, -inf
          %592 = vmax.xlane.f32.xlu0 %v591
          %v593 = vpop.xlane.xlu0 %592
          %v594 = vsel %vm584, %v581, -inf
          %595 = vmax.xlane.f32.xlu0 %v594
          %v596 = vpop.xlane.xlu0 %595
          %v597 = vsub.f32 %v524, %v587
          %v598 = vsub.f32 %v543, %v590
          %v599 = vsub.f32 %v562, %v593
          %v600 = vsub.f32 %v581, %v596
          %v601 = vmul.f32 %v597, 1.442695
          %v602 = vpow.pop %v601
          %v603 = vmul.f32 %v598, 1.442695
          %v604 = vpow.pop %v603
          %v605 = vmul.f32 %v599, 1.442695
          %v606 = vpow.pop %v605
          %v607 = vmul.f32 %v600, 1.442695
          %v608 = vpow.pop %v607
          %v609 = vsel %vm584, %v602, 0.0
          %610 = vadd.xlane.f32.xlu0 %v609
          %v611 = vpop.xlane.xlu0 %610
          %v612 = vsel %vm584, %v604, 0.0
          %613 = vadd.xlane.f32.xlu0 %v612
          %v614 = vpop.xlane.xlu0 %613
          %v615 = vsel %vm584, %v606, 0.0
          %616 = vadd.xlane.f32.xlu0 %v615
          %v617 = vpop.xlane.xlu0 %616
          %v618 = vsel %vm584, %v608, 0.0
          %619 = vadd.xlane.f32.xlu0 %v618
          %v620 = vpop.xlane.xlu0 %619
          %v621 = vrcp.pop %v611
          %v622 = vrcp.pop %v614
          %v623 = vrcp.pop %v617
          %v624 = vrcp.pop %v620
          %v625 = vmul.f32 %v602, %v621
          %v626 = vmul.f32 %v604, %v622
          %v627 = vmul.f32 %v606, %v623
          %v628 = vmul.f32 %v608, %v624
          %v629 = vpack.c.bf16 %v625, %v625
          %v630 = vpack.c.bf16 %v626, %v626
          %v631 = vpack.c.bf16 %v627, %v627
          %v632 = vpack.c.bf16 %v628, %v628
          %v634 = vsel %vm584, %v629, 0
          %vm636 = vcmask 1043456
          %v638 = vsel %vm636, %v503, 0
          %640 = vmatpush.bf16.msra.mxu0 0
          %641 = vmatpush.bf16.msra.mxu0 0
          %642 = vmatpush.bf16.msra.mxu0 0
          %643 = vmatpush.bf16.msra.mxu0 0
          %644 = vmatpush.bf16.msra.mxu0 0
          %645 = vmatpush.bf16.msra.mxu0 0
          %646 = vmatpush.bf16.msra.mxu0 0
          %647 = vmatpush.bf16.msra.mxu0 %v638
          %648 = vmatmul.bf16.gmra.mxu0 %v634
          %v649 = vpop.f32.mrf.mxu0
          %v650 = vadd.f32 0.0, %v649
          %v651 = vpop.f32.mrf.mxu0
          %652 = vdwg.mxu0
          %v654 = vsel %vm584, %v630, 0
          %v657 = vsel %vm636, %v504, 0
          %659 = vmatpush.bf16.msra.mxu0 0
          %660 = vmatpush.bf16.msra.mxu0 0
          %661 = vmatpush.bf16.msra.mxu0 0
          %662 = vmatpush.bf16.msra.mxu0 0
          %663 = vmatpush.bf16.msra.mxu0 0
          %664 = vmatpush.bf16.msra.mxu0 0
          %665 = vmatpush.bf16.msra.mxu0 0
          %666 = vmatpush.bf16.msra.mxu0 %v657
          %667 = vmatmul.bf16.gmra.mxu0 %v654
          %v668 = vpop.f32.mrf.mxu0
          %v669 = vadd.f32 0.0, %v668
          %v670 = vpop.f32.mrf.mxu0
          %671 = vdwg.mxu0
          %v673 = vsel %vm584, %v631, 0
          %v676 = vsel %vm636, %v505, 0
          %678 = vmatpush.bf16.msra.mxu0 0
          %679 = vmatpush.bf16.msra.mxu0 0
          %680 = vmatpush.bf16.msra.mxu0 0
          %681 = vmatpush.bf16.msra.mxu0 0
          %682 = vmatpush.bf16.msra.mxu0 0
          %683 = vmatpush.bf16.msra.mxu0 0
          %684 = vmatpush.bf16.msra.mxu0 0
          %685 = vmatpush.bf16.msra.mxu0 %v676
          %686 = vmatmul.bf16.gmra.mxu0 %v673
          %v687 = vpop.f32.mrf.mxu0
          %v688 = vadd.f32 0.0, %v687
          %v689 = vpop.f32.mrf.mxu0
          %690 = vdwg.mxu0
          %v692 = vsel %vm584, %v632, 0
          %v695 = vsel %vm636, %v506, 0
          %697 = vmatpush.bf16.msra.mxu0 0
          %698 = vmatpush.bf16.msra.mxu0 0
          %699 = vmatpush.bf16.msra.mxu0 0
          %700 = vmatpush.bf16.msra.mxu0 0
          %701 = vmatpush.bf16.msra.mxu0 0
          %702 = vmatpush.bf16.msra.mxu0 0
          %703 = vmatpush.bf16.msra.mxu0 0
          %704 = vmatpush.bf16.msra.mxu0 %v695
          %705 = vmatmul.bf16.gmra.mxu0 %v692
          %v706 = vpop.f32.mrf.mxu0
          %v707 = vadd.f32 0.0, %v706
          %v708 = vpop.f32.mrf.mxu0
          %709 = vdwg.mxu0
          %v710 = vpack.c.bf16 %v650, %v650
          %v711 = vpack.c.bf16 %v669, %v669
          %v712 = vpack.c.bf16 %v688, %v688
          %v713 = vpack.c.bf16 %v707, %v707
          %v715 = vunpack.c.l.b16 %v711
          %v716 = vpack.c.b16 %v715, %v715
          %717 = vrot.lane.b32.xlu0 %v716, 16
          %v718 = vpop.permute.xlu0 %717
          %v720 = vunpack.c.l.b16 %v712
          %v721 = vpack.c.b16 %v720, %v720
          %722 = vrot.lane.b32.xlu0 %v721, 32
          %v723 = vpop.permute.xlu0 %722
          %v725 = vunpack.c.l.b16 %v713
          %v726 = vpack.c.b16 %v725, %v725
          %727 = vrot.lane.b32.xlu0 %v726, 48
          %v728 = vpop.permute.xlu0 %727
          %v731 = vsel %vm507, %v710, %v718
          %vm732 = vcmask 261120
          %v734 = vsel %vm732, %v731, %v723
          %vm735 = vcmask 392192
          %v737 = vsel %vm735, %v734, %v728
          %v738 = vld [vmem:[%s3] sm:$0xf]
          %v739 = vld [vmem:[%s3 + $0x4] sm:$0xf]
          %v740 = vld [vmem:[%s3 + $0x8] sm:$0xf]
          %v741 = vld [vmem:[%s3 + $0xc] sm:$0xf]
          %v742 = vld [vmem:[%s3 + $0x10] sm:$0xf]
          %v743 = vld [vmem:[%s3 + $0x14] sm:$0xf]
          %v744 = vld [vmem:[%s3 + $0x18] sm:$0xf]
          %v745 = vld [vmem:[%s3 + $0x1c] sm:$0xf]
          %v746 = vld [vmem:[%s4] sm:$0x1]
          %v748 = vperm.slane %v746, 0
          %v758 = vunpack.c.l.b16 %v738
          %v759 = vunpack.c.l.b16 %v739
          %v760 = vunpack.c.l.b16 %v740
          %v761 = vunpack.c.l.b16 %v741
          %v762 = vunpack.c.l.b16 %v742
          %v763 = vunpack.c.l.b16 %v743
          %v764 = vunpack.c.l.b16 %v744
          %v765 = vunpack.c.l.b16 %v745
          %v766 = vpack.c.b16 %v759, %v758
          %v767 = vpack.c.b16 %v761, %v760
          %v768 = vpack.c.b16 %v763, %v762
          %v769 = vpack.c.b16 %v765, %v764
          %vm774 = vcmask 523264
          %v775 = vsel %vm774, %v737, 0
          %777 = vmatpush.bf16.msra.mxu0 0
          %778 = vmatpush.bf16.msra.mxu0 0
          %779 = vmatpush.bf16.msra.mxu0 0
          %780 = vmatpush.bf16.msra.mxu0 0
          %781 = vmatpush.bf16.msra.mxu0 %v769
          %782 = vmatpush.bf16.msra.mxu0 %v768
          %783 = vmatpush.bf16.msra.mxu0 %v767
          %784 = vmatpush.bf16.msra.mxu0 %v766
          %785 = vmatmul.bf16.gmra.mxu0 %v775
          %v786 = vpop.f32.mrf.mxu0
          %v787 = vadd.f32 %v748, %v786
          %v788 = vpop.f32.mrf.mxu0
          %789 = vdwg.mxu0
          %v790 = vpack.c.bf16 %v787, %v787
          %v791 = vld [vmem:[%s5] sm:$0xf]
          %v792 = vld [vmem:[%s5 + $0x4] sm:$0xf]
          %v793 = vld [vmem:[%s5 + $0x8] sm:$0xf]
          %v794 = vld [vmem:[%s5 + $0xc] sm:$0xf]
          %v795 = vld [vmem:[%s5 + $0x10] sm:$0xf]
          %v796 = vld [vmem:[%s5 + $0x14] sm:$0xf]
          %v797 = vld [vmem:[%s5 + $0x18] sm:$0xf]
          %v798 = vld [vmem:[%s5 + $0x1c] sm:$0xf]
          %v799 = vld [vmem:[%s6] sm:$0x1]
          %v801 = vperm.slane %v799, 0
          %v811 = vunpack.c.l.b16 %v791
          %v812 = vunpack.c.l.b16 %v792
          %v813 = vunpack.c.l.b16 %v793
          %v814 = vunpack.c.l.b16 %v794
          %v815 = vunpack.c.l.b16 %v795
          %v816 = vunpack.c.l.b16 %v796
          %v817 = vunpack.c.l.b16 %v797
          %v818 = vunpack.c.l.b16 %v798
          %v819 = vpack.c.b16 %v812, %v811
          %v820 = vpack.c.b16 %v814, %v813
          %v821 = vpack.c.b16 %v816, %v815
          %v822 = vpack.c.b16 %v818, %v817
          %v828 = vsel %vm774, %v790, 0
          %830 = vmatpush.bf16.msra.mxu0 0
          %831 = vmatpush.bf16.msra.mxu0 0
          %832 = vmatpush.bf16.msra.mxu0 0
          %833 = vmatpush.bf16.msra.mxu0 0
          %834 = vmatpush.bf16.msra.mxu0 %v822
          %835 = vmatpush.bf16.msra.mxu0 %v821
          %836 = vmatpush.bf16.msra.mxu0 %v820
          %837 = vmatpush.bf16.msra.mxu0 %v819
          %838 = vmatmul.bf16.gmra.mxu0 %v828
          %v839 = vpop.f32.mrf.mxu0
          %v840 = vadd.f32 %v801, %v839
          %v841 = vpop.f32.mrf.mxu0
          %842 = vdwg.mxu0
          %v843 = vmax.f32 %v840, 0.0
          %v844 = vpack.c.bf16 %v843, %v843
          %v845 = vld [vmem:[%s7] sm:$0xf]
          %v846 = vld [vmem:[%s7 + $0x4] sm:$0xf]
          %v847 = vld [vmem:[%s7 + $0x8] sm:$0xf]
          %v848 = vld [vmem:[%s7 + $0xc] sm:$0xf]
          %v849 = vld [vmem:[%s7 + $0x10] sm:$0xf]
          %v850 = vld [vmem:[%s7 + $0x14] sm:$0xf]
          %v851 = vld [vmem:[%s7 + $0x18] sm:$0xf]
          %v852 = vld [vmem:[%s7 + $0x1c] sm:$0xf]
          %v853 = vld [vmem:[%s8] sm:$0x1]
          %v855 = vperm.slane %v853, 0
          %v865 = vunpack.c.l.b16 %v845
          %v866 = vunpack.c.l.b16 %v846
          %v867 = vunpack.c.l.b16 %v847
          %v868 = vunpack.c.l.b16 %v848
          %v869 = vunpack.c.l.b16 %v849
          %v870 = vunpack.c.l.b16 %v850
          %v871 = vunpack.c.l.b16 %v851
          %v872 = vunpack.c.l.b16 %v852
          %v873 = vpack.c.b16 %v866, %v865
          %v874 = vpack.c.b16 %v868, %v867
          %v875 = vpack.c.b16 %v870, %v869
          %v876 = vpack.c.b16 %v872, %v871
          %v882 = vsel %vm774, %v844, 0
          %884 = vmatpush.bf16.msra.mxu0 0
          %885 = vmatpush.bf16.msra.mxu0 0
          %886 = vmatpush.bf16.msra.mxu0 0
          %887 = vmatpush.bf16.msra.mxu0 0
          %888 = vmatpush.bf16.msra.mxu0 %v876
          %889 = vmatpush.bf16.msra.mxu0 %v875
          %890 = vmatpush.bf16.msra.mxu0 %v874
          %891 = vmatpush.bf16.msra.mxu0 %v873
          %892 = vmatmul.bf16.gmra.mxu0 %v882
          %v893 = vpop.f32.mrf.mxu0
          %v894 = vadd.f32 %v855, %v893
          %v895 = vpop.f32.mrf.mxu0
          %896 = vdwg.mxu0
          %v897 = vpack.c.bf16 %v894, %v894
          %vm898 = vcmask 519168
          %899 = vst.msk [vmem:[#allocation2] sm:$0xf] %vm898, %v897
        $region68: #{_lambda_.3} parent=63 // pred_fallthru
          _
        %v900 = vld [vmem:[#allocation2] sm:$0xf]
        %v901 = vld [vmem:[%s486] sm:$0xf]
        %v902 = vld [vmem:[%s486 + $0x4] sm:$0xf]
        %v903 = vld [vmem:[%s486 + $0x8] sm:$0xf]
        %v904 = vld [vmem:[%s486 + $0xc] sm:$0xf]
        %v905 = vld [vmem:[%s486 + $0x10] sm:$0xf]
        %v906 = vld [vmem:[%s486 + $0x14] sm:$0xf]
        %v907 = vld [vmem:[%s486 + $0x18] sm:$0xf]
        %v908 = vld [vmem:[%s486 + $0x1c] sm:$0xf]
        %v909 = vld [vmem:[%s489] sm:$0x1]
        %v911 = vperm.slane %v909, 0
        %v921 = vunpack.c.l.b16 %v901
        %v922 = vunpack.c.l.b16 %v902
        %v923 = vunpack.c.l.b16 %v903
        %v924 = vunpack.c.l.b16 %v904
        %v925 = vunpack.c.l.b16 %v905
        %v926 = vunpack.c.l.b16 %v906
        %v927 = vunpack.c.l.b16 %v907
        %v928 = vunpack.c.l.b16 %v908
        %v929 = vpack.c.b16 %v922, %v921
        %v930 = vpack.c.b16 %v924, %v923
        %v931 = vpack.c.b16 %v926, %v925
        %v932 = vpack.c.b16 %v928, %v927
        %vm937 = vcmask 523264
        %v939 = vsel %vm937, %v900, 0
        %941 = vmatpush.bf16.msra.mxu0 0
        %942 = vmatpush.bf16.msra.mxu0 0
        %943 = vmatpush.bf16.msra.mxu0 0
        %944 = vmatpush.bf16.msra.mxu0 0
        %945 = vmatpush.bf16.msra.mxu0 %v932
        %946 = vmatpush.bf16.msra.mxu0 %v931
        %947 = vmatpush.bf16.msra.mxu0 %v930
        %948 = vmatpush.bf16.msra.mxu0 %v929
        %949 = vmatmul.bf16.gmra.mxu0 %v939
        %v950 = vpop.f32.mrf.mxu0
        %v951 = vadd.f32 %v911, %v950
        %v952 = vpop.f32.mrf.mxu0
        %953 = vdwg.mxu0
        %v954 = vpack.c.bf16 %v951, %v951
        %955 = vst [vmem:[%s464] sm:$0xf] %v954
        %s956 = sand.u32 %s314, 1
        %s957 = scalar_lea.sflag [#allocation4], %s956
        %s958 = sand.u32 %s314, 1
        %s959 = smul.addr %s958, 4
        %s960 = scalar_lea.vmem [#allocation3], %s959
        // Predicated region
        $region69: #{_lambda_.3} parent=63 // pred_check
          %p961 = pneg %p324
        $region70: #{_lambda_.3} parent=63 // pred_check_branch
          %963 = sbr.rel (%p961) target = $region72
        $region71: #{_lambda_.3} parent=63 // pred_region
          %965 = vsyncadd %s957, 0
          %s966 = sadd.s32 %s32, %s31
          %s967 = sadd.s32 %s966, %s30
          %s968 = smul.addr %s967, 4
          %s969 = scalar_lea.hbm %s11, %s968
          %s971 = sshll.u32 %s960, 4
          %s972 = int_to_ptr.vmem [resolvable:$true] %s971
          %s973 = sshll.u32 %s969, 4
          %s974 = int_to_ptr.hbm [resolvable:$true] %s973
          %976 = dma.vmem_to_hbm [thread:$0]  %s972, 64, %s974, %s957
        $region72: #{_lambda_.3} parent=63 // pred_fallthru
          _
      $region64: #{_lambda_.3} parent=5 // pred_fallthru
        _
      %p977 = scmp.le.s32.totalorder 2, %s20
      // Predicated region
      $region73: #{_lambda_.3} parent=5 // pred_check
        %p978 = pneg %p977
      $region74: #{_lambda_.3} parent=5 // pred_check_branch
        %980 = sbr.rel (%p978) target = $region76
      $region75: #{_lambda_.3} parent=5 // pred_region
        %s981 = ssub.s32 %s20, 2
        // Predicated region
        $region77: #{_lambda_.3} parent=75 // pred_check
          %p982 = pneg %p330
        $region78: #{_lambda_.3} parent=75 // pred_check_branch
          %984 = sbr.rel (%p982) target = $region80
        $region79: #{_lambda_.3} parent=75 // pred_region
          %s985 = sand.u32 %s315, 1
          %s986 = scalar_lea.sflag [#allocation4], %s985
          %s987 = sand.u32 %s315, 1
          %s988 = smul.addr %s987, 4
          %s989 = scalar_lea.vmem [#allocation3], %s988
          %991 = dma.done %s986, 64
        $region80: #{_lambda_.3} parent=75 // pred_fallthru
          _
      $region76: #{_lambda_.3} parent=5 // pred_fallthru
        _
    $region6: #{_lambda_.3} parent=1 // loop_footer
      %s24 = sadd.s32 1, %s20
    $region7: #{_lambda_.3} parent=1 // loop_footer_branch
      %19 = sbr.rel target = $region3
    $region8: #{_lambda_.3} parent=1 // loop_exit
      _
    %992 = vsyncpa [#allocation4], 1
    %s993 = scalar_lea.sflag [#allocation4], 1
    %994 = vsyncpa %s993, 1

</llo_original>
